<compile_context>
chip_gen: v6e
topology: v6e:2x2x1
jax: 0.10.0
libtpu: 0.0.40
codegen_flags: <defaults>
</compile_context>

<pallas_src>
import numpy as np

import jax
import jax.numpy as jnp
from jax import lax
from jax.experimental import pallas as pl

# ---------------- config (mirrors the argparse `args`) ----------------
NTOKENS = [32]                    # 1 channel: the READ enc/dec path assumes it
NUM_CHANNELS = len(NTOKENS)
EMSIZE = 16
NHID = 32
NLAYERS = 1
GATES_NHID = 8
INPUT_FEED_NUM = 0                # fc5/fc6/default_future path is dead
DROPOUT = 0.0
RNN_TYPE = "RNN"
BATCH = 2
SEQLEN = 8


# ---------------- compile-time plan from host metadata ----------------
def _build_static_plan(measure_boundaries, sdm, T, B):
    """For every timestep: which batch rows hit a measure boundary (with slot
    count and SDM deltas as Python floats) and which rows have the output gate
    active.  Plain Python, baked into the kernel (no operands, no DMAs)."""
    beg = [[s[0] for s in measure_boundaries[b]] for b in range(B)]
    counts = [0] * B
    plan = []
    for t in range(T):
        bnd_rows = []
        for b in range(B):
            if t in beg[b] and t != 0:
                counts[b] += 1
                c = counts[b]
                assert len(sdm[b]) > c and len(sdm[b][c]) >= c, \
                    "self-distance matrix too small for boundary count"
                bnd_rows.append((b, c, [float(sdm[b][c][i]) for i in range(c)]))
        gate_rows = tuple(b for b in range(B) if len(beg[b]) > 1 and t >= beg[b][1])
        plan.append((tuple(bnd_rows), gate_rows))
    return plan


# ---------------- fused Pallas kernel ----------------
def _make_fused_kernel(plan):
    T = len(plan)

    def kernel(xproj_eb_ref, xproj_d_ref, whh_eb_ref, whh_d_ref,
               gates_pack_ref, wdec_full_ref, logits_ref, hid_ref):
        f32 = jnp.float32
        B = xproj_eb_ref.shape[1]
        H = whh_d_ref.shape[0]

        # hoisted weight loads (once per kernel, not per step)
        whh_eb = whh_eb_ref[...]                       # (2H, 2H) block-diagonal
        whh_d = whh_d_ref[...]                         # (H, H)
        w1h = gates_pack_ref[0:H, :]                   # (H, G) fc1 weight, enc part
        small = gates_pack_ref[H:H + 8, :]             # packed tiny rows
        w1d = small[0:1, :]                            # fc1 delta column
        b1 = small[1:2, :]
        w2 = small[2:3, :]
        w3 = small[3:4, :]
        b3 = small[4:5, :]
        w4 = small[5:6, :]
        b2 = small[6:7, 0:1]
        b4 = small[6:7, 1:2]

        row_ids = lax.broadcasted_iota(jnp.int32, (B, 1), 0)
        lane_ids = lax.broadcasted_iota(jnp.int32, (B, 2 * H), 1)

        eb_h = jnp.zeros((B, 2 * H), f32)              # [enc_h | backbone_h]
        dec_h = jnp.zeros((B, H), f32)
        dtil = jnp.zeros((B, 1), f32)
        encs = [[] for _ in range(B)]                  # measure-encoding slots (static)
        outs = []

        for t in range(T):                             # static unroll over the sequence
            bnd_rows, gate_rows = plan[t]

            # (1) encoder + backbone RNNCell recurrence: one block-diag matmul;
            #     x @ W_ih (+ both biases) is already folded into xproj_eb.
            eb_h = jnp.tanh(xproj_eb_ref[t]
                            + jnp.dot(eb_h, whh_eb, preferred_element_type=f32))

            # (2) measure-boundary "self-attention", only emitted where it fires
            for (b, count, deltas) in bnd_rows:
                enc_b = eb_h[b:b + 1, 0:H]                      # fresh enc_h, row b
                encs[b].append(enc_b)
                if count > 1:
                    E = jnp.concatenate(encs[b], axis=0)        # (count, H)
                    dcol = jnp.concatenate([d * w1d for d in deltas], axis=0)
                else:
                    E = encs[b][0]
                    dcol = deltas[0] * w1d
                # batched fc1 over all slots, then vectorized tanh(fc2(.))
                z = jnp.dot(E, w1h, preferred_element_type=f32) + dcol + b1
                s = jnp.tanh(jnp.sum(z * w2, axis=1, keepdims=True) + b2)   # (count,1)
                mx = jnp.max(s, axis=0, keepdims=True)
                ex = jnp.exp(s - mx)
                sm = ex / jnp.sum(ex, axis=0, keepdims=True)                # softmax
                dec_h0 = jnp.sum(sm * E, axis=0, keepdims=True)             # (1, H)
                dt_b = deltas[0] * sm[0:1, 0:1]
                for i in range(1, count):
                    dt_b = dt_b + deltas[i] * sm[i:i + 1, 0:1]
                rmask = row_ids == b
                dec_h = jnp.where(rmask, dec_h0, dec_h)
                dtil = jnp.where(rmask, dt_b, dtil)
                eb_h = jnp.where(rmask & (lane_ids < H), 0.0, eb_h)   # reset enc part

            # (3) decoder RNNCell recurrence (input projection prefolded)
            dec_h = jnp.tanh(xproj_d_ref[t]
                             + jnp.dot(dec_h, whh_d, preferred_element_type=f32))

            # (4) output gate: alpha = sigmoid(fc4(fc3(delta_tilde))), only where active
            bb_h = eb_h[:, H:]
            if gate_rows:
                a1 = dtil * w3 + b3
                alpha = jax.nn.sigmoid(jnp.sum(a1 * w4, axis=1, keepdims=True) + b4)
                gated = alpha * dec_h + (1.0 - alpha) * bb_h
                if len(gate_rows) == B:
                    out_t = gated
                else:
                    gm = row_ids == gate_rows[0]
                    for b in gate_rows[1:]:
                        gm = gm | (row_ids == b)
                    out_t = jnp.where(gm, gated, bb_h)
            else:
                out_t = bb_h
            outs.append(out_t)

        # (5) emb_decoder: ONE matmul over all timesteps, ONE store
        out_all = jnp.concatenate(outs, axis=0)                    # (T*B, H)
        wdec = wdec_full_ref[0:H, :]
        bdec = wdec_full_ref[H:H + 1, :]
        logits_ref[...] = jnp.dot(out_all, wdec, preferred_element_type=f32) + bdec

        hid_ref[0] = eb_h[:, H:]     # backbone
        hid_ref[1] = eb_h[:, 0:H]    # enc_rnn
        hid_ref[2] = dec_h           # dec_rnn

    return kernel


def build_fused_forward(measure_boundaries, sdm, T, B):
    assert len(measure_boundaries) == B and len(sdm) == B, "metadata/batch mismatch"
    plan = _build_static_plan(measure_boundaries, sdm, T, B)
    kernel = _make_fused_kernel(plan)
    H, G, V = NHID, GATES_NHID, NTOKENS[0]

    @jax.jit
    def fwd(p, tokens):            # tokens: (B, T) int32, channel 0
        assert tokens.shape == (B, T), "tokens must match the baked boundary schedule"
        enc_c, bb_c, dec_c = p["encoder_rnn"], p["rnn"], p["decoder_rnn"]

        # Fold every cell's input projection (and b_ih + b_hh) into its embedding
        # table, so the kernel recurrence contains only h @ W_hh matmuls.
        enc_tab = p["enc_emb"][0] @ enc_c["w_ih"].T + (enc_c["b_ih"] + enc_c["b_hh"])
        bb_tab = p["backbone_emb"][0] @ bb_c["w_ih"].T + (bb_c["b_ih"] + bb_c["b_hh"])
        dec_tab = p["dec_emb"][0] @ dec_c["w_ih"].T + (dec_c["b_ih"] + dec_c["b_hh"])
        eb_tab = jnp.concatenate([enc_tab, bb_tab], axis=1)            # (V, 2H)
        xproj_eb = jnp.transpose(eb_tab[tokens], (1, 0, 2)).astype(jnp.float32)
        xproj_d = jnp.transpose(dec_tab[tokens], (1, 0, 2)).astype(jnp.float32)

        whh_eb = jnp.zeros((2 * H, 2 * H), jnp.float32)
        whh_eb = whh_eb.at[:H, :H].set(enc_c["w_hh"].T).at[H:, H:].set(bb_c["w_hh"].T)
        whh_d = dec_c["w_hh"].T

        w1 = p["fc1"]["w"]                                             # (G, H+1)
        b2b4 = jnp.zeros((1, G), jnp.float32)
        b2b4 = b2b4.at[0, 0].set(p["fc2"]["b"][0]).at[0, 1].set(p["fc4"]["b"][0])
        gates_pack = jnp.concatenate([
            w1[:, :H].T,                           # rows 0:H   fc1 weight (enc part)
            w1[:, H:].T,                           # row H      fc1 delta column
            p["fc1"]["b"].reshape(1, G),           # row H+1
            p["fc2"]["w"].reshape(1, G),           # row H+2
            p["fc3"]["w"].T.reshape(1, G),         # row H+3
            p["fc3"]["b"].reshape(1, G),           # row H+4
            p["fc4"]["w"].reshape(1, G),           # row H+5
            b2b4,                                  # row H+6    [fc2.b, fc4.b, 0, ...]
            jnp.zeros((1, G), jnp.float32),        # row H+7    pad
        ], axis=0)                                                     # (H+8, G)

        wdec_full = jnp.concatenate([p["emb_decoder"][0]["w"].T,
                                     p["emb_decoder"][0]["b"].reshape(1, V)],
                                    axis=0)                            # (H+1, V)

        logits_flat, hid = pl.pallas_call(
            kernel,
            out_shape=(jax.ShapeDtypeStruct((T * B, V), jnp.float32),
                       jax.ShapeDtypeStruct((3, B, H), jnp.float32)),
        )(xproj_eb, xproj_d, whh_eb, whh_d, gates_pack, wdec_full)

        logits = jnp.transpose(logits_flat.reshape(T, B, V), (1, 0, 2))  # (B, T, V)
        decs = [logits]
        hidden = {"backbone": hid[0], "enc_rnn": hid[1], "dec_rnn": hid[2]}
        return decs, hidden

    return fwd


# ---------------- parameters ----------------
def init_params(key):
    ks = iter(jax.random.split(key, 40))

    def mat(shape, scale=0.1):
        return scale * jax.random.normal(next(ks), shape, dtype=jnp.float32)

    def rnn_cell():
        return dict(w_ih=mat((NHID, EMSIZE * NUM_CHANNELS)),
                    w_hh=mat((NHID, NHID)),
                    b_ih=mat((NHID,)), b_hh=mat((NHID,)))

    p = {}
    p["backbone_emb"] = [mat((NTOKENS[c], EMSIZE)) for c in range(NUM_CHANNELS)]
    p["enc_emb"] = [mat((NTOKENS[c], EMSIZE)) for c in range(NUM_CHANNELS)]
    p["dec_emb"] = [mat((NTOKENS[c], EMSIZE)) for c in range(NUM_CHANNELS)]
    p["rnn"] = rnn_cell()              # backbone RNNCell
    p["encoder_rnn"] = rnn_cell()
    p["decoder_rnn"] = rnn_cell()
    p["emb_decoder"] = [dict(w=mat((NTOKENS[c], NHID)),
                             b=jnp.zeros((NTOKENS[c],), jnp.float32))
                        for c in range(NUM_CHANNELS)]
    p["fc1"] = dict(w=mat((GATES_NHID, NHID + 1)), b=mat((GATES_NHID,)))
    p["fc2"] = dict(w=mat((1, GATES_NHID)), b=mat((1,)))
    p["fc3"] = dict(w=mat((GATES_NHID, 1)), b=mat((GATES_NHID,)))
    p["fc4"] = dict(w=mat((1, GATES_NHID)), b=mat((1,)))
    # TODO(synk): fc5/fc6/default_future exist in the module but are dead when
    # input_feed_num == 0; forward_ss / get_future_encoding are not exercised.
    return p


# ---------------- pure-JAX reference (faithful eager port, for validation) ----------------
def _cell_ref(par, x, h):
    return jnp.tanh(x @ par["w_ih"].T + par["b_ih"] + h @ par["w_hh"].T + par["b_hh"])


def self_attention_ref(p, prev_measure_encs, delta):
    vs = []
    for i, enc in enumerate(prev_measure_encs):
        x = jnp.concatenate([enc.reshape(-1), jnp.asarray([delta[i]], jnp.float32)])
        x = x @ p["fc1"]["w"].T + p["fc1"]["b"]
        x = jnp.tanh(x @ p["fc2"]["w"].T + p["fc2"]["b"])
        vs.append(x)
    sm = jax.nn.softmax(jnp.concatenate(vs))
    encs = jnp.concatenate(prev_measure_encs, axis=0)
    decoder_h0 = jnp.sum(encs * sm[:, None], axis=0, keepdims=True)
    d = jnp.asarray([delta[i] for i in range(len(prev_measure_encs))], jnp.float32)
    delta_tilde = jnp.sum(d * sm).reshape(1)
    return decoder_h0, delta_tilde


def output_gate_ref(p, h_backbone, h_dec, delta_tilde):
    x = delta_tilde @ p["fc3"]["w"].T + p["fc3"]["b"]
    x = x @ p["fc4"]["w"].T + p["fc4"]["b"]
    alpha = jax.nn.sigmoid(x)
    return alpha * h_dec + (1.0 - alpha) * h_backbone


def forward_ref(p, inputs, sdm, measure_boundaries):
    bsz, T = inputs[0].shape
    beg_idxs = [[s[0] for s in measure_boundaries[b]] for b in range(bsz)]
    embs = [p["backbone_emb"][c][inputs[c]] for c in range(NUM_CHANNELS)]
    rnn_input = jnp.concatenate(embs, axis=2)
    bb_h = jnp.zeros((bsz, NHID), jnp.float32)
    enc_h = jnp.zeros((bsz, NHID), jnp.float32)
    dec_h = jnp.zeros((bsz, NHID), jnp.float32)
    prev_encs = [[] for _ in range(bsz)]
    delta_tilde = [None] * bsz
    outputs = []
    for t in range(T):
        tok_t = inputs[0][:, t]
        enc_x = p["enc_emb"][0][tok_t]
        dec_x = p["dec_emb"][0][tok_t]
        enc_h = _cell_ref(p["encoder_rnn"], enc_x, enc_h)
        for b in range(bsz):
            if t in beg_idxs[b] and t != 0:
                prev_encs[b].append(enc_h[b:b + 1])
                dh0, dt = self_attention_ref(p, prev_encs[b], sdm[b][len(prev_encs[b])])
                delta_tilde[b] = dt
                dec_h = dec_h.at[b].set(dh0[0])
                enc_h = enc_h.at[b].set(0.0)
        dec_h = _cell_ref(p["decoder_rnn"], dec_x, dec_h)
        bb_h = _cell_ref(p["rnn"], rnn_input[:, t], bb_h)
        outs_b = []
        for b in range(bsz):
            hb = bb_h[b:b + 1]
            if len(beg_idxs[b]) <= 1 or t < beg_idxs[b][1]:
                outs_b.append(hb)
            else:
                outs_b.append(output_gate_ref(p, hb, dec_h[b:b + 1], delta_tilde[b]))
        outputs.append(jnp.concatenate(outs_b, axis=0))
    output = jnp.stack(outputs, axis=1)                      # (B, T, H)
    decs = []
    for c in range(NUM_CHANNELS):
        dd = (output.reshape(bsz * T, NHID) @ p["emb_decoder"][c]["w"].T
              + p["emb_decoder"][c]["b"])
        decs.append(dd.reshape(bsz, T, NTOKENS[c]))
    hidden = {"backbone": bb_h, "enc_rnn": enc_h, "dec_rnn": dec_h}
    return decs, hidden


if __name__ == "__main__":
    key = jax.random.PRNGKey(0)
    pkey, dkey = jax.random.split(key)
    params = init_params(pkey)

    # data['data'] : per-channel token ids
    inputs = [jax.random.randint(dkey, (BATCH, SEQLEN), 0, NTOKENS[0],
                                 dtype=jnp.int32)]
    # data['conditions'][0] : self-distance matrix (host nested lists, as in the module)
    sdm = [[[0.1 * (i + j) + 0.05 * b for j in range(4)] for i in range(4)]
           for b in range(BATCH)]
    # data['metadata'][0] : per-sample (measure_begin, next_measure_begin) pairs
    measure_boundaries = [[(0, 3), (3, 6), (6, SEQLEN)],
                          [(0, 4), (4, SEQLEN)]]

    fwd = build_fused_forward(measure_boundaries, sdm, SEQLEN, BATCH)
    decs, hidden = fwd(params, inputs[0])
    decs = jax.block_until_ready(decs)

    decs_ref, hidden_ref = forward_ref(params, inputs, sdm, measure_boundaries)
    for a, r in zip(decs, decs_ref):
        assert a.shape == (BATCH, SEQLEN, NTOKENS[0])
        assert jnp.allclose(a, r, atol=2e-4, rtol=2e-4), "Pallas vs JAX ref mismatch (decs)"
    for k in ("backbone", "enc_rnn", "dec_rnn"):
        assert jnp.allclose(hidden[k], hidden_ref[k], atol=2e-4, rtol=2e-4), \
            f"Pallas vs JAX ref mismatch (hidden[{k}])"

    print("KERNEL_OK")
</pallas_src>

<mosaic_0001>
module attributes {stable_mosaic.version = 11 : i64} {
  func.func @kernel(%arg0: memref<8x2x64xf32, #tpu.memory_space<vmem>>, %arg1: memref<8x2x32xf32, #tpu.memory_space<vmem>>, %arg2: memref<64x64xf32, #tpu.memory_space<vmem>>, %arg3: memref<32x32xf32, #tpu.memory_space<vmem>>, %arg4: memref<40x8xf32, #tpu.memory_space<vmem>>, %arg5: memref<33x32xf32, #tpu.memory_space<vmem>>, %arg6: memref<16x32xf32, #tpu.memory_space<vmem>>, %arg7: memref<3x2x32xf32, #tpu.memory_space<vmem>>) attributes {dimension_semantics = [], scalar_prefetch = 0 : i64, scratch_operands = 0 : i64, tpu.core_type = #tpu.core_type<tc>} {
    %c0 = arith.constant 0 : index
    %c0_0 = arith.constant 0 : index
    %0 = vector.load %arg2[%c0, %c0_0] : memref<64x64xf32, #tpu.memory_space<vmem>>, vector<64x64xf32>
    %c0_1 = arith.constant 0 : index
    %c0_2 = arith.constant 0 : index
    %1 = vector.load %arg3[%c0_1, %c0_2] : memref<32x32xf32, #tpu.memory_space<vmem>>, vector<32x32xf32>
    %c0_3 = arith.constant 0 : index
    %c0_4 = arith.constant 0 : index
    %2 = vector.load %arg4[%c0_3, %c0_4] : memref<40x8xf32, #tpu.memory_space<vmem>>, vector<32x8xf32>
    %c32 = arith.constant 32 : index
    %c0_5 = arith.constant 0 : index
    %3 = vector.load %arg4[%c32, %c0_5] : memref<40x8xf32, #tpu.memory_space<vmem>>, vector<8x8xf32>
    %4 = vector.extract_strided_slice %3 {offsets = [0, 0], sizes = [1, 8], strides = [1, 1]} : vector<8x8xf32> to vector<1x8xf32>
    %5 = vector.extract_strided_slice %3 {offsets = [1, 0], sizes = [1, 8], strides = [1, 1]} : vector<8x8xf32> to vector<1x8xf32>
    %6 = vector.extract_strided_slice %3 {offsets = [2, 0], sizes = [1, 8], strides = [1, 1]} : vector<8x8xf32> to vector<1x8xf32>
    %7 = vector.extract_strided_slice %3 {offsets = [3, 0], sizes = [1, 8], strides = [1, 1]} : vector<8x8xf32> to vector<1x8xf32>
    %8 = vector.extract_strided_slice %3 {offsets = [4, 0], sizes = [1, 8], strides = [1, 1]} : vector<8x8xf32> to vector<1x8xf32>
    %9 = vector.extract_strided_slice %3 {offsets = [5, 0], sizes = [1, 8], strides = [1, 1]} : vector<8x8xf32> to vector<1x8xf32>
    %10 = vector.extract_strided_slice %3 {offsets = [6, 0], sizes = [1, 1], strides = [1, 1]} : vector<8x8xf32> to vector<1x1xf32>
    %11 = vector.extract_strided_slice %3 {offsets = [6, 1], sizes = [1, 1], strides = [1, 1]} : vector<8x8xf32> to vector<1x1xf32>
    %12 = tpu.iota {dimensions = array<i32: 0>} : vector<2x1xi32>
    %13 = tpu.iota {dimensions = array<i32: 1>} : vector<2x64xi32>
    %cst = arith.constant 0.000000e+00 : f32
    %14 = vector.broadcast %cst : f32 to vector<2x64xf32>
    %cst_6 = arith.constant 0.000000e+00 : f32
    %15 = vector.broadcast %cst_6 : f32 to vector<2x32xf32>
    %cst_7 = arith.constant 0.000000e+00 : f32
    %16 = vector.broadcast %cst_7 : f32 to vector<2x1xf32>
    %c0_8 = arith.constant 0 : index
    %c0_9 = arith.constant 0 : index
    %c0_10 = arith.constant 0 : index
    %17 = vector.load %arg0[%c0_8, %c0_9, %c0_10] : memref<8x2x64xf32, #tpu.memory_space<vmem>>, vector<1x2x64xf32>
    %18 = vector.shape_cast %17 : vector<1x2x64xf32> to vector<2x64xf32>
    %cst_11 = arith.constant dense<0.000000e+00> : vector<2x64xf32>
    %19 = tpu.matmul %14, %0, %cst_11 {dimension_numbers = #tpu.dot_dimension_numbers<[1], [0], [0], [1], [0, 0, 1, 1], [], []>} : vector<2x64xf32>, vector<64x64xf32>, vector<2x64xf32> -> vector<2x64xf32>
    %20 = arith.addf %18, %19 : vector<2x64xf32>
    %21 = math.tanh %20 : vector<2x64xf32>
    %c0_12 = arith.constant 0 : index
    %c0_13 = arith.constant 0 : index
    %c0_14 = arith.constant 0 : index
    %22 = vector.load %arg1[%c0_12, %c0_13, %c0_14] : memref<8x2x32xf32, #tpu.memory_space<vmem>>, vector<1x2x32xf32>
    %23 = vector.shape_cast %22 : vector<1x2x32xf32> to vector<2x32xf32>
    %cst_15 = arith.constant dense<0.000000e+00> : vector<2x32xf32>
    %24 = tpu.matmul %15, %1, %cst_15 {dimension_numbers = #tpu.dot_dimension_numbers<[1], [0], [0], [1], [0, 0, 1, 1], [], []>} : vector<2x32xf32>, vector<32x32xf32>, vector<2x32xf32> -> vector<2x32xf32>
    %25 = arith.addf %23, %24 : vector<2x32xf32>
    %26 = math.tanh %25 : vector<2x32xf32>
    %27 = vector.extract_strided_slice %21 {offsets = [0, 32], sizes = [2, 32], strides = [1, 1]} : vector<2x64xf32> to vector<2x32xf32>
    %c1 = arith.constant 1 : index
    %c0_16 = arith.constant 0 : index
    %c0_17 = arith.constant 0 : index
    %28 = vector.load %arg0[%c1, %c0_16, %c0_17] : memref<8x2x64xf32, #tpu.memory_space<vmem>>, vector<1x2x64xf32>
    %29 = vector.shape_cast %28 : vector<1x2x64xf32> to vector<2x64xf32>
    %cst_18 = arith.constant dense<0.000000e+00> : vector<2x64xf32>
    %30 = tpu.matmul %21, %0, %cst_18 {dimension_numbers = #tpu.dot_dimension_numbers<[1], [0], [0], [1], [0, 0, 1, 1], [], []>} : vector<2x64xf32>, vector<64x64xf32>, vector<2x64xf32> -> vector<2x64xf32>
    %31 = arith.addf %29, %30 : vector<2x64xf32>
    %32 = math.tanh %31 : vector<2x64xf32>
    %c1_19 = arith.constant 1 : index
    %c0_20 = arith.constant 0 : index
    %c0_21 = arith.constant 0 : index
    %33 = vector.load %arg1[%c1_19, %c0_20, %c0_21] : memref<8x2x32xf32, #tpu.memory_space<vmem>>, vector<1x2x32xf32>
    %34 = vector.shape_cast %33 : vector<1x2x32xf32> to vector<2x32xf32>
    %cst_22 = arith.constant dense<0.000000e+00> : vector<2x32xf32>
    %35 = tpu.matmul %26, %1, %cst_22 {dimension_numbers = #tpu.dot_dimension_numbers<[1], [0], [0], [1], [0, 0, 1, 1], [], []>} : vector<2x32xf32>, vector<32x32xf32>, vector<2x32xf32> -> vector<2x32xf32>
    %36 = arith.addf %34, %35 : vector<2x32xf32>
    %37 = math.tanh %36 : vector<2x32xf32>
    %38 = vector.extract_strided_slice %32 {offsets = [0, 32], sizes = [2, 32], strides = [1, 1]} : vector<2x64xf32> to vector<2x32xf32>
    %c2 = arith.constant 2 : index
    %c0_23 = arith.constant 0 : index
    %c0_24 = arith.constant 0 : index
    %39 = vector.load %arg0[%c2, %c0_23, %c0_24] : memref<8x2x64xf32, #tpu.memory_space<vmem>>, vector<1x2x64xf32>
    %40 = vector.shape_cast %39 : vector<1x2x64xf32> to vector<2x64xf32>
    %cst_25 = arith.constant dense<0.000000e+00> : vector<2x64xf32>
    %41 = tpu.matmul %32, %0, %cst_25 {dimension_numbers = #tpu.dot_dimension_numbers<[1], [0], [0], [1], [0, 0, 1, 1], [], []>} : vector<2x64xf32>, vector<64x64xf32>, vector<2x64xf32> -> vector<2x64xf32>
    %42 = arith.addf %40, %41 : vector<2x64xf32>
    %43 = math.tanh %42 : vector<2x64xf32>
    %c2_26 = arith.constant 2 : index
    %c0_27 = arith.constant 0 : index
    %c0_28 = arith.constant 0 : index
    %44 = vector.load %arg1[%c2_26, %c0_27, %c0_28] : memref<8x2x32xf32, #tpu.memory_space<vmem>>, vector<1x2x32xf32>
    %45 = vector.shape_cast %44 : vector<1x2x32xf32> to vector<2x32xf32>
    %cst_29 = arith.constant dense<0.000000e+00> : vector<2x32xf32>
    %46 = tpu.matmul %37, %1, %cst_29 {dimension_numbers = #tpu.dot_dimension_numbers<[1], [0], [0], [1], [0, 0, 1, 1], [], []>} : vector<2x32xf32>, vector<32x32xf32>, vector<2x32xf32> -> vector<2x32xf32>
    %47 = arith.addf %45, %46 : vector<2x32xf32>
    %48 = math.tanh %47 : vector<2x32xf32>
    %49 = vector.extract_strided_slice %43 {offsets = [0, 32], sizes = [2, 32], strides = [1, 1]} : vector<2x64xf32> to vector<2x32xf32>
    %c3 = arith.constant 3 : index
    %c0_30 = arith.constant 0 : index
    %c0_31 = arith.constant 0 : index
    %50 = vector.load %arg0[%c3, %c0_30, %c0_31] : memref<8x2x64xf32, #tpu.memory_space<vmem>>, vector<1x2x64xf32>
    %51 = vector.shape_cast %50 : vector<1x2x64xf32> to vector<2x64xf32>
    %cst_32 = arith.constant dense<0.000000e+00> : vector<2x64xf32>
    %52 = tpu.matmul %43, %0, %cst_32 {dimension_numbers = #tpu.dot_dimension_numbers<[1], [0], [0], [1], [0, 0, 1, 1], [], []>} : vector<2x64xf32>, vector<64x64xf32>, vector<2x64xf32> -> vector<2x64xf32>
    %53 = arith.addf %51, %52 : vector<2x64xf32>
    %54 = math.tanh %53 : vector<2x64xf32>
    %55 = vector.extract_strided_slice %54 {offsets = [0, 0], sizes = [1, 32], strides = [1, 1]} : vector<2x64xf32> to vector<1x32xf32>
    %cst_33 = arith.constant 1.000000e-01 : f32
    %56 = vector.broadcast %cst_33 : f32 to vector<1x8xf32>
    %57 = arith.mulf %56, %4 : vector<1x8xf32>
    %cst_34 = arith.constant dense<0.000000e+00> : vector<1x8xf32>
    %58 = tpu.matmul %55, %2, %cst_34 {dimension_numbers = #tpu.dot_dimension_numbers<[1], [0], [0], [1], [0, 0, 1, 1], [], []>} : vector<1x32xf32>, vector<32x8xf32>, vector<1x8xf32> -> vector<1x8xf32>
    %59 = arith.addf %58, %57 : vector<1x8xf32>
    %60 = arith.addf %59, %5 : vector<1x8xf32>
    %61 = arith.mulf %60, %6 : vector<1x8xf32>
    %cst_35 = arith.constant dense<0.000000e+00> : vector<1xf32>
    %62 = vector.multi_reduction <add>, %61, %cst_35 [1] : vector<1x8xf32> to vector<1xf32>
    %63 = vector.shape_cast %62 : vector<1xf32> to vector<1x1xf32>
    %64 = arith.addf %63, %10 : vector<1x1xf32>
    %65 = math.tanh %64 : vector<1x1xf32>
    %cst_36 = arith.constant dense<0xFF800000> : vector<1xf32>
    %66 = vector.multi_reduction <maximumf>, %65, %cst_36 [0] : vector<1x1xf32> to vector<1xf32>
    %67 = vector.shape_cast %66 : vector<1xf32> to vector<1x1xf32>
    %68 = arith.subf %65, %67 : vector<1x1xf32>
    %69 = math.exp %68 : vector<1x1xf32>
    %cst_37 = arith.constant dense<0.000000e+00> : vector<1xf32>
    %70 = vector.multi_reduction <add>, %69, %cst_37 [0] : vector<1x1xf32> to vector<1xf32>
    %71 = vector.shape_cast %70 : vector<1xf32> to vector<1x1xf32>
    %72 = arith.divf %69, %71 : vector<1x1xf32>
    %73 = vector.broadcast %72 : vector<1x1xf32> to vector<1x32xf32>
    %74 = arith.mulf %73, %55 : vector<1x32xf32>
    %cst_38 = arith.constant dense<0.000000e+00> : vector<32xf32>
    %75 = vector.multi_reduction <add>, %74, %cst_38 [0] : vector<1x32xf32> to vector<32xf32>
    %76 = vector.shape_cast %75 : vector<32xf32> to vector<1x32xf32>
    %cst_39 = arith.constant 1.000000e-01 : f32
    %77 = vector.broadcast %cst_39 : f32 to vector<1x1xf32>
    %78 = arith.mulf %77, %72 : vector<1x1xf32>
    %c0_i32 = arith.constant 0 : i32
    %79 = vector.broadcast %c0_i32 : i32 to vector<2x1xi32>
    %80 = arith.cmpi eq, %12, %79 : vector<2x1xi32>
    %81 = vector.shape_cast %80 : vector<2x1xi1> to vector<2x1xi1>
    %82 = vector.broadcast %81 : vector<2x1xi1> to vector<2x32xi1>
    %83 = vector.shape_cast %76 : vector<1x32xf32> to vector<1x32xf32>
    %84 = vector.broadcast %83 : vector<1x32xf32> to vector<2x32xf32>
    %85 = arith.select %82, %84, %48 : vector<2x32xi1>, vector<2x32xf32>
    %86 = vector.shape_cast %78 : vector<1x1xf32> to vector<1x1xf32>
    %87 = vector.broadcast %86 : vector<1x1xf32> to vector<2x1xf32>
    %88 = arith.select %80, %87, %16 : vector<2x1xi1>, vector<2x1xf32>
    %c32_i32 = arith.constant 32 : i32
    %89 = vector.broadcast %c32_i32 : i32 to vector<2x64xi32>
    %90 = arith.cmpi slt, %13, %89 : vector<2x64xi32>
    %91 = vector.broadcast %80 : vector<2x1xi1> to vector<2x64xi1>
    %92 = arith.andi %91, %90 : vector<2x64xi1>
    %cst_40 = arith.constant 0.000000e+00 : f32
    %93 = vector.broadcast %cst_40 : f32 to vector<2x64xf32>
    %94 = arith.select %92, %93, %54 : vector<2x64xi1>, vector<2x64xf32>
    %c3_41 = arith.constant 3 : index
    %c0_42 = arith.constant 0 : index
    %c0_43 = arith.constant 0 : index
    %95 = vector.load %arg1[%c3_41, %c0_42, %c0_43] : memref<8x2x32xf32, #tpu.memory_space<vmem>>, vector<1x2x32xf32>
    %96 = vector.shape_cast %95 : vector<1x2x32xf32> to vector<2x32xf32>
    %cst_44 = arith.constant dense<0.000000e+00> : vector<2x32xf32>
    %97 = tpu.matmul %85, %1, %cst_44 {dimension_numbers = #tpu.dot_dimension_numbers<[1], [0], [0], [1], [0, 0, 1, 1], [], []>} : vector<2x32xf32>, vector<32x32xf32>, vector<2x32xf32> -> vector<2x32xf32>
    %98 = arith.addf %96, %97 : vector<2x32xf32>
    %99 = math.tanh %98 : vector<2x32xf32>
    %100 = vector.extract_strided_slice %94 {offsets = [0, 32], sizes = [2, 32], strides = [1, 1]} : vector<2x64xf32> to vector<2x32xf32>
    %101 = vector.broadcast %88 : vector<2x1xf32> to vector<2x8xf32>
    %102 = vector.broadcast %7 : vector<1x8xf32> to vector<2x8xf32>
    %103 = arith.mulf %101, %102 : vector<2x8xf32>
    %104 = vector.broadcast %8 : vector<1x8xf32> to vector<2x8xf32>
    %105 = arith.addf %103, %104 : vector<2x8xf32>
    %106 = vector.broadcast %9 : vector<1x8xf32> to vector<2x8xf32>
    %107 = arith.mulf %105, %106 : vector<2x8xf32>
    %cst_45 = arith.constant dense<0.000000e+00> : vector<2xf32>
    %108 = vector.multi_reduction <add>, %107, %cst_45 [1] : vector<2x8xf32> to vector<2xf32>
    %109 = vector.shape_cast %108 : vector<2xf32> to vector<2x1xf32>
    %110 = vector.broadcast %11 : vector<1x1xf32> to vector<2x1xf32>
    %111 = arith.addf %109, %110 : vector<2x1xf32>
    %112 = arith.negf %111 : vector<2x1xf32>
    %113 = math.exp %112 : vector<2x1xf32>
    %cst_46 = arith.constant 1.000000e+00 : f32
    %114 = vector.broadcast %cst_46 : f32 to vector<2x1xf32>
    %115 = arith.addf %114, %113 : vector<2x1xf32>
    %116 = arith.divf %114, %115 : vector<2x1xf32>
    %117 = vector.broadcast %116 : vector<2x1xf32> to vector<2x32xf32>
    %118 = arith.mulf %117, %99 : vector<2x32xf32>
    %cst_47 = arith.constant 1.000000e+00 : f32
    %119 = vector.broadcast %cst_47 : f32 to vector<2x1xf32>
    %120 = arith.subf %119, %116 : vector<2x1xf32>
    %121 = vector.broadcast %120 : vector<2x1xf32> to vector<2x32xf32>
    %122 = arith.mulf %121, %100 : vector<2x32xf32>
    %123 = arith.addf %118, %122 : vector<2x32xf32>
    %c0_i32_48 = arith.constant 0 : i32
    %124 = vector.broadcast %c0_i32_48 : i32 to vector<2x1xi32>
    %125 = arith.cmpi eq, %12, %124 : vector<2x1xi32>
    %126 = vector.shape_cast %125 : vector<2x1xi1> to vector<2x1xi1>
    %127 = vector.broadcast %126 : vector<2x1xi1> to vector<2x32xi1>
    %128 = arith.select %127, %123, %100 : vector<2x32xi1>, vector<2x32xf32>
    %c4 = arith.constant 4 : index
    %c0_49 = arith.constant 0 : index
    %c0_50 = arith.constant 0 : index
    %129 = vector.load %arg0[%c4, %c0_49, %c0_50] : memref<8x2x64xf32, #tpu.memory_space<vmem>>, vector<1x2x64xf32>
    %130 = vector.shape_cast %129 : vector<1x2x64xf32> to vector<2x64xf32>
    %cst_51 = arith.constant dense<0.000000e+00> : vector<2x64xf32>
    %131 = tpu.matmul %94, %0, %cst_51 {dimension_numbers = #tpu.dot_dimension_numbers<[1], [0], [0], [1], [0, 0, 1, 1], [], []>} : vector<2x64xf32>, vector<64x64xf32>, vector<2x64xf32> -> vector<2x64xf32>
    %132 = arith.addf %130, %131 : vector<2x64xf32>
    %133 = math.tanh %132 : vector<2x64xf32>
    %134 = vector.extract_strided_slice %133 {offsets = [1, 0], sizes = [1, 32], strides = [1, 1]} : vector<2x64xf32> to vector<1x32xf32>
    %cst_52 = arith.constant 1.500000e-01 : f32
    %135 = vector.broadcast %cst_52 : f32 to vector<1x8xf32>
    %136 = arith.mulf %135, %4 : vector<1x8xf32>
    %cst_53 = arith.constant dense<0.000000e+00> : vector<1x8xf32>
    %137 = tpu.matmul %134, %2, %cst_53 {dimension_numbers = #tpu.dot_dimension_numbers<[1], [0], [0], [1], [0, 0, 1, 1], [], []>} : vector<1x32xf32>, vector<32x8xf32>, vector<1x8xf32> -> vector<1x8xf32>
    %138 = arith.addf %137, %136 : vector<1x8xf32>
    %139 = arith.addf %138, %5 : vector<1x8xf32>
    %140 = arith.mulf %139, %6 : vector<1x8xf32>
    %cst_54 = arith.constant dense<0.000000e+00> : vector<1xf32>
    %141 = vector.multi_reduction <add>, %140, %cst_54 [1] : vector<1x8xf32> to vector<1xf32>
    %142 = vector.shape_cast %141 : vector<1xf32> to vector<1x1xf32>
    %143 = arith.addf %142, %10 : vector<1x1xf32>
    %144 = math.tanh %143 : vector<1x1xf32>
    %cst_55 = arith.constant dense<0xFF800000> : vector<1xf32>
    %145 = vector.multi_reduction <maximumf>, %144, %cst_55 [0] : vector<1x1xf32> to vector<1xf32>
    %146 = vector.shape_cast %145 : vector<1xf32> to vector<1x1xf32>
    %147 = arith.subf %144, %146 : vector<1x1xf32>
    %148 = math.exp %147 : vector<1x1xf32>
    %cst_56 = arith.constant dense<0.000000e+00> : vector<1xf32>
    %149 = vector.multi_reduction <add>, %148, %cst_56 [0] : vector<1x1xf32> to vector<1xf32>
    %150 = vector.shape_cast %149 : vector<1xf32> to vector<1x1xf32>
    %151 = arith.divf %148, %150 : vector<1x1xf32>
    %152 = vector.broadcast %151 : vector<1x1xf32> to vector<1x32xf32>
    %153 = arith.mulf %152, %134 : vector<1x32xf32>
    %cst_57 = arith.constant dense<0.000000e+00> : vector<32xf32>
    %154 = vector.multi_reduction <add>, %153, %cst_57 [0] : vector<1x32xf32> to vector<32xf32>
    %155 = vector.shape_cast %154 : vector<32xf32> to vector<1x32xf32>
    %cst_58 = arith.constant 1.500000e-01 : f32
    %156 = vector.broadcast %cst_58 : f32 to vector<1x1xf32>
    %157 = arith.mulf %156, %151 : vector<1x1xf32>
    %c1_i32 = arith.constant 1 : i32
    %158 = vector.broadcast %c1_i32 : i32 to vector<2x1xi32>
    %159 = arith.cmpi eq, %12, %158 : vector<2x1xi32>
    %160 = vector.shape_cast %159 : vector<2x1xi1> to vector<2x1xi1>
    %161 = vector.broadcast %160 : vector<2x1xi1> to vector<2x32xi1>
    %162 = vector.shape_cast %155 : vector<1x32xf32> to vector<1x32xf32>
    %163 = vector.broadcast %162 : vector<1x32xf32> to vector<2x32xf32>
    %164 = arith.select %161, %163, %99 : vector<2x32xi1>, vector<2x32xf32>
    %165 = vector.shape_cast %157 : vector<1x1xf32> to vector<1x1xf32>
    %166 = vector.broadcast %165 : vector<1x1xf32> to vector<2x1xf32>
    %167 = arith.select %159, %166, %88 : vector<2x1xi1>, vector<2x1xf32>
    %c32_i32_59 = arith.constant 32 : i32
    %168 = vector.broadcast %c32_i32_59 : i32 to vector<2x64xi32>
    %169 = arith.cmpi slt, %13, %168 : vector<2x64xi32>
    %170 = vector.broadcast %159 : vector<2x1xi1> to vector<2x64xi1>
    %171 = arith.andi %170, %169 : vector<2x64xi1>
    %cst_60 = arith.constant 0.000000e+00 : f32
    %172 = vector.broadcast %cst_60 : f32 to vector<2x64xf32>
    %173 = arith.select %171, %172, %133 : vector<2x64xi1>, vector<2x64xf32>
    %c4_61 = arith.constant 4 : index
    %c0_62 = arith.constant 0 : index
    %c0_63 = arith.constant 0 : index
    %174 = vector.load %arg1[%c4_61, %c0_62, %c0_63] : memref<8x2x32xf32, #tpu.memory_space<vmem>>, vector<1x2x32xf32>
    %175 = vector.shape_cast %174 : vector<1x2x32xf32> to vector<2x32xf32>
    %cst_64 = arith.constant dense<0.000000e+00> : vector<2x32xf32>
    %176 = tpu.matmul %164, %1, %cst_64 {dimension_numbers = #tpu.dot_dimension_numbers<[1], [0], [0], [1], [0, 0, 1, 1], [], []>} : vector<2x32xf32>, vector<32x32xf32>, vector<2x32xf32> -> vector<2x32xf32>
    %177 = arith.addf %175, %176 : vector<2x32xf32>
    %178 = math.tanh %177 : vector<2x32xf32>
    %179 = vector.extract_strided_slice %173 {offsets = [0, 32], sizes = [2, 32], strides = [1, 1]} : vector<2x64xf32> to vector<2x32xf32>
    %180 = vector.broadcast %167 : vector<2x1xf32> to vector<2x8xf32>
    %181 = vector.broadcast %7 : vector<1x8xf32> to vector<2x8xf32>
    %182 = arith.mulf %180, %181 : vector<2x8xf32>
    %183 = vector.broadcast %8 : vector<1x8xf32> to vector<2x8xf32>
    %184 = arith.addf %182, %183 : vector<2x8xf32>
    %185 = vector.broadcast %9 : vector<1x8xf32> to vector<2x8xf32>
    %186 = arith.mulf %184, %185 : vector<2x8xf32>
    %cst_65 = arith.constant dense<0.000000e+00> : vector<2xf32>
    %187 = vector.multi_reduction <add>, %186, %cst_65 [1] : vector<2x8xf32> to vector<2xf32>
    %188 = vector.shape_cast %187 : vector<2xf32> to vector<2x1xf32>
    %189 = vector.broadcast %11 : vector<1x1xf32> to vector<2x1xf32>
    %190 = arith.addf %188, %189 : vector<2x1xf32>
    %191 = arith.negf %190 : vector<2x1xf32>
    %192 = math.exp %191 : vector<2x1xf32>
    %cst_66 = arith.constant 1.000000e+00 : f32
    %193 = vector.broadcast %cst_66 : f32 to vector<2x1xf32>
    %194 = arith.addf %193, %192 : vector<2x1xf32>
    %195 = arith.divf %193, %194 : vector<2x1xf32>
    %196 = vector.broadcast %195 : vector<2x1xf32> to vector<2x32xf32>
    %197 = arith.mulf %196, %178 : vector<2x32xf32>
    %cst_67 = arith.constant 1.000000e+00 : f32
    %198 = vector.broadcast %cst_67 : f32 to vector<2x1xf32>
    %199 = arith.subf %198, %195 : vector<2x1xf32>
    %200 = vector.broadcast %199 : vector<2x1xf32> to vector<2x32xf32>
    %201 = arith.mulf %200, %179 : vector<2x32xf32>
    %202 = arith.addf %197, %201 : vector<2x32xf32>
    %c5 = arith.constant 5 : index
    %c0_68 = arith.constant 0 : index
    %c0_69 = arith.constant 0 : index
    %203 = vector.load %arg0[%c5, %c0_68, %c0_69] : memref<8x2x64xf32, #tpu.memory_space<vmem>>, vector<1x2x64xf32>
    %204 = vector.shape_cast %203 : vector<1x2x64xf32> to vector<2x64xf32>
    %cst_70 = arith.constant dense<0.000000e+00> : vector<2x64xf32>
    %205 = tpu.matmul %173, %0, %cst_70 {dimension_numbers = #tpu.dot_dimension_numbers<[1], [0], [0], [1], [0, 0, 1, 1], [], []>} : vector<2x64xf32>, vector<64x64xf32>, vector<2x64xf32> -> vector<2x64xf32>
    %206 = arith.addf %204, %205 : vector<2x64xf32>
    %207 = math.tanh %206 : vector<2x64xf32>
    %c5_71 = arith.constant 5 : index
    %c0_72 = arith.constant 0 : index
    %c0_73 = arith.constant 0 : index
    %208 = vector.load %arg1[%c5_71, %c0_72, %c0_73] : memref<8x2x32xf32, #tpu.memory_space<vmem>>, vector<1x2x32xf32>
    %209 = vector.shape_cast %208 : vector<1x2x32xf32> to vector<2x32xf32>
    %cst_74 = arith.constant dense<0.000000e+00> : vector<2x32xf32>
    %210 = tpu.matmul %178, %1, %cst_74 {dimension_numbers = #tpu.dot_dimension_numbers<[1], [0], [0], [1], [0, 0, 1, 1], [], []>} : vector<2x32xf32>, vector<32x32xf32>, vector<2x32xf32> -> vector<2x32xf32>
    %211 = arith.addf %209, %210 : vector<2x32xf32>
    %212 = math.tanh %211 : vector<2x32xf32>
    %213 = vector.extract_strided_slice %207 {offsets = [0, 32], sizes = [2, 32], strides = [1, 1]} : vector<2x64xf32> to vector<2x32xf32>
    %214 = vector.broadcast %167 : vector<2x1xf32> to vector<2x8xf32>
    %215 = vector.broadcast %7 : vector<1x8xf32> to vector<2x8xf32>
    %216 = arith.mulf %214, %215 : vector<2x8xf32>
    %217 = vector.broadcast %8 : vector<1x8xf32> to vector<2x8xf32>
    %218 = arith.addf %216, %217 : vector<2x8xf32>
    %219 = vector.broadcast %9 : vector<1x8xf32> to vector<2x8xf32>
    %220 = arith.mulf %218, %219 : vector<2x8xf32>
    %cst_75 = arith.constant dense<0.000000e+00> : vector<2xf32>
    %221 = vector.multi_reduction <add>, %220, %cst_75 [1] : vector<2x8xf32> to vector<2xf32>
    %222 = vector.shape_cast %221 : vector<2xf32> to vector<2x1xf32>
    %223 = vector.broadcast %11 : vector<1x1xf32> to vector<2x1xf32>
    %224 = arith.addf %222, %223 : vector<2x1xf32>
    %225 = arith.negf %224 : vector<2x1xf32>
    %226 = math.exp %225 : vector<2x1xf32>
    %cst_76 = arith.constant 1.000000e+00 : f32
    %227 = vector.broadcast %cst_76 : f32 to vector<2x1xf32>
    %228 = arith.addf %227, %226 : vector<2x1xf32>
    %229 = arith.divf %227, %228 : vector<2x1xf32>
    %230 = vector.broadcast %229 : vector<2x1xf32> to vector<2x32xf32>
    %231 = arith.mulf %230, %212 : vector<2x32xf32>
    %cst_77 = arith.constant 1.000000e+00 : f32
    %232 = vector.broadcast %cst_77 : f32 to vector<2x1xf32>
    %233 = arith.subf %232, %229 : vector<2x1xf32>
    %234 = vector.broadcast %233 : vector<2x1xf32> to vector<2x32xf32>
    %235 = arith.mulf %234, %213 : vector<2x32xf32>
    %236 = arith.addf %231, %235 : vector<2x32xf32>
    %c6 = arith.constant 6 : index
    %c0_78 = arith.constant 0 : index
    %c0_79 = arith.constant 0 : index
    %237 = vector.load %arg0[%c6, %c0_78, %c0_79] : memref<8x2x64xf32, #tpu.memory_space<vmem>>, vector<1x2x64xf32>
    %238 = vector.shape_cast %237 : vector<1x2x64xf32> to vector<2x64xf32>
    %cst_80 = arith.constant dense<0.000000e+00> : vector<2x64xf32>
    %239 = tpu.matmul %207, %0, %cst_80 {dimension_numbers = #tpu.dot_dimension_numbers<[1], [0], [0], [1], [0, 0, 1, 1], [], []>} : vector<2x64xf32>, vector<64x64xf32>, vector<2x64xf32> -> vector<2x64xf32>
    %240 = arith.addf %238, %239 : vector<2x64xf32>
    %241 = math.tanh %240 : vector<2x64xf32>
    %242 = vector.extract_strided_slice %241 {offsets = [0, 0], sizes = [1, 32], strides = [1, 1]} : vector<2x64xf32> to vector<1x32xf32>
    %243 = tpu.concatenate %55, %242 in 0 : vector<1x32xf32>, vector<1x32xf32> -> vector<2x32xf32>
    %cst_81 = arith.constant 2.000000e-01 : f32
    %244 = vector.broadcast %cst_81 : f32 to vector<1x8xf32>
    %245 = arith.mulf %244, %4 : vector<1x8xf32>
    %cst_82 = arith.constant 3.000000e-01 : f32
    %246 = vector.broadcast %cst_82 : f32 to vector<1x8xf32>
    %247 = arith.mulf %246, %4 : vector<1x8xf32>
    %248 = tpu.concatenate %245, %247 in 0 : vector<1x8xf32>, vector<1x8xf32> -> vector<2x8xf32>
    %cst_83 = arith.constant dense<0.000000e+00> : vector<2x8xf32>
    %249 = tpu.matmul %243, %2, %cst_83 {dimension_numbers = #tpu.dot_dimension_numbers<[1], [0], [0], [1], [0, 0, 1, 1], [], []>} : vector<2x32xf32>, vector<32x8xf32>, vector<2x8xf32> -> vector<2x8xf32>
    %250 = arith.addf %249, %248 : vector<2x8xf32>
    %251 = vector.broadcast %5 : vector<1x8xf32> to vector<2x8xf32>
    %252 = arith.addf %250, %251 : vector<2x8xf32>
    %253 = vector.broadcast %6 : vector<1x8xf32> to vector<2x8xf32>
    %254 = arith.mulf %252, %253 : vector<2x8xf32>
    %cst_84 = arith.constant dense<0.000000e+00> : vector<2xf32>
    %255 = vector.multi_reduction <add>, %254, %cst_84 [1] : vector<2x8xf32> to vector<2xf32>
    %256 = vector.shape_cast %255 : vector<2xf32> to vector<2x1xf32>
    %257 = vector.broadcast %10 : vector<1x1xf32> to vector<2x1xf32>
    %258 = arith.addf %256, %257 : vector<2x1xf32>
    %259 = math.tanh %258 : vector<2x1xf32>
    %cst_85 = arith.constant dense<0xFF800000> : vector<1xf32>
    %260 = vector.multi_reduction <maximumf>, %259, %cst_85 [0] : vector<2x1xf32> to vector<1xf32>
    %261 = vector.shape_cast %260 : vector<1xf32> to vector<1x1xf32>
    %262 = vector.broadcast %261 : vector<1x1xf32> to vector<2x1xf32>
    %263 = arith.subf %259, %262 : vector<2x1xf32>
    %264 = math.exp %263 : vector<2x1xf32>
    %cst_86 = arith.constant dense<0.000000e+00> : vector<1xf32>
    %265 = vector.multi_reduction <add>, %264, %cst_86 [0] : vector<2x1xf32> to vector<1xf32>
    %266 = vector.shape_cast %265 : vector<1xf32> to vector<1x1xf32>
    %267 = vector.broadcast %266 : vector<1x1xf32> to vector<2x1xf32>
    %268 = arith.divf %264, %267 : vector<2x1xf32>
    %269 = vector.broadcast %268 : vector<2x1xf32> to vector<2x32xf32>
    %270 = arith.mulf %269, %243 : vector<2x32xf32>
    %cst_87 = arith.constant dense<0.000000e+00> : vector<32xf32>
    %271 = vector.multi_reduction <add>, %270, %cst_87 [0] : vector<2x32xf32> to vector<32xf32>
    %272 = vector.shape_cast %271 : vector<32xf32> to vector<1x32xf32>
    %273 = vector.extract_strided_slice %268 {offsets = [0, 0], sizes = [1, 1], strides = [1, 1]} : vector<2x1xf32> to vector<1x1xf32>
    %cst_88 = arith.constant 2.000000e-01 : f32
    %274 = vector.broadcast %cst_88 : f32 to vector<1x1xf32>
    %275 = arith.mulf %274, %273 : vector<1x1xf32>
    %276 = vector.extract_strided_slice %268 {offsets = [1, 0], sizes = [1, 1], strides = [1, 1]} : vector<2x1xf32> to vector<1x1xf32>
    %cst_89 = arith.constant 3.000000e-01 : f32
    %277 = vector.broadcast %cst_89 : f32 to vector<1x1xf32>
    %278 = arith.mulf %277, %276 : vector<1x1xf32>
    %279 = arith.addf %275, %278 : vector<1x1xf32>
    %c0_i32_90 = arith.constant 0 : i32
    %280 = vector.broadcast %c0_i32_90 : i32 to vector<2x1xi32>
    %281 = arith.cmpi eq, %12, %280 : vector<2x1xi32>
    %282 = vector.shape_cast %281 : vector<2x1xi1> to vector<2x1xi1>
    %283 = vector.broadcast %282 : vector<2x1xi1> to vector<2x32xi1>
    %284 = vector.shape_cast %272 : vector<1x32xf32> to vector<1x32xf32>
    %285 = vector.broadcast %284 : vector<1x32xf32> to vector<2x32xf32>
    %286 = arith.select %283, %285, %212 : vector<2x32xi1>, vector<2x32xf32>
    %287 = vector.shape_cast %279 : vector<1x1xf32> to vector<1x1xf32>
    %288 = vector.broadcast %287 : vector<1x1xf32> to vector<2x1xf32>
    %289 = arith.select %281, %288, %167 : vector<2x1xi1>, vector<2x1xf32>
    %c32_i32_91 = arith.constant 32 : i32
    %290 = vector.broadcast %c32_i32_91 : i32 to vector<2x64xi32>
    %291 = arith.cmpi slt, %13, %290 : vector<2x64xi32>
    %292 = vector.broadcast %281 : vector<2x1xi1> to vector<2x64xi1>
    %293 = arith.andi %292, %291 : vector<2x64xi1>
    %cst_92 = arith.constant 0.000000e+00 : f32
    %294 = vector.broadcast %cst_92 : f32 to vector<2x64xf32>
    %295 = arith.select %293, %294, %241 : vector<2x64xi1>, vector<2x64xf32>
    %c6_93 = arith.constant 6 : index
    %c0_94 = arith.constant 0 : index
    %c0_95 = arith.constant 0 : index
    %296 = vector.load %arg1[%c6_93, %c0_94, %c0_95] : memref<8x2x32xf32, #tpu.memory_space<vmem>>, vector<1x2x32xf32>
    %297 = vector.shape_cast %296 : vector<1x2x32xf32> to vector<2x32xf32>
    %cst_96 = arith.constant dense<0.000000e+00> : vector<2x32xf32>
    %298 = tpu.matmul %286, %1, %cst_96 {dimension_numbers = #tpu.dot_dimension_numbers<[1], [0], [0], [1], [0, 0, 1, 1], [], []>} : vector<2x32xf32>, vector<32x32xf32>, vector<2x32xf32> -> vector<2x32xf32>
    %299 = arith.addf %297, %298 : vector<2x32xf32>
    %300 = math.tanh %299 : vector<2x32xf32>
    %301 = vector.extract_strided_slice %295 {offsets = [0, 32], sizes = [2, 32], strides = [1, 1]} : vector<2x64xf32> to vector<2x32xf32>
    %302 = vector.broadcast %289 : vector<2x1xf32> to vector<2x8xf32>
    %303 = vector.broadcast %7 : vector<1x8xf32> to vector<2x8xf32>
    %304 = arith.mulf %302, %303 : vector<2x8xf32>
    %305 = vector.broadcast %8 : vector<1x8xf32> to vector<2x8xf32>
    %306 = arith.addf %304, %305 : vector<2x8xf32>
    %307 = vector.broadcast %9 : vector<1x8xf32> to vector<2x8xf32>
    %308 = arith.mulf %306, %307 : vector<2x8xf32>
    %cst_97 = arith.constant dense<0.000000e+00> : vector<2xf32>
    %309 = vector.multi_reduction <add>, %308, %cst_97 [1] : vector<2x8xf32> to vector<2xf32>
    %310 = vector.shape_cast %309 : vector<2xf32> to vector<2x1xf32>
    %311 = vector.broadcast %11 : vector<1x1xf32> to vector<2x1xf32>
    %312 = arith.addf %310, %311 : vector<2x1xf32>
    %313 = arith.negf %312 : vector<2x1xf32>
    %314 = math.exp %313 : vector<2x1xf32>
    %cst_98 = arith.constant 1.000000e+00 : f32
    %315 = vector.broadcast %cst_98 : f32 to vector<2x1xf32>
    %316 = arith.addf %315, %314 : vector<2x1xf32>
    %317 = arith.divf %315, %316 : vector<2x1xf32>
    %318 = vector.broadcast %317 : vector<2x1xf32> to vector<2x32xf32>
    %319 = arith.mulf %318, %300 : vector<2x32xf32>
    %cst_99 = arith.constant 1.000000e+00 : f32
    %320 = vector.broadcast %cst_99 : f32 to vector<2x1xf32>
    %321 = arith.subf %320, %317 : vector<2x1xf32>
    %322 = vector.broadcast %321 : vector<2x1xf32> to vector<2x32xf32>
    %323 = arith.mulf %322, %301 : vector<2x32xf32>
    %324 = arith.addf %319, %323 : vector<2x32xf32>
    %c7 = arith.constant 7 : index
    %c0_100 = arith.constant 0 : index
    %c0_101 = arith.constant 0 : index
    %325 = vector.load %arg0[%c7, %c0_100, %c0_101] : memref<8x2x64xf32, #tpu.memory_space<vmem>>, vector<1x2x64xf32>
    %326 = vector.shape_cast %325 : vector<1x2x64xf32> to vector<2x64xf32>
    %cst_102 = arith.constant dense<0.000000e+00> : vector<2x64xf32>
    %327 = tpu.matmul %295, %0, %cst_102 {dimension_numbers = #tpu.dot_dimension_numbers<[1], [0], [0], [1], [0, 0, 1, 1], [], []>} : vector<2x64xf32>, vector<64x64xf32>, vector<2x64xf32> -> vector<2x64xf32>
    %328 = arith.addf %326, %327 : vector<2x64xf32>
    %329 = math.tanh %328 : vector<2x64xf32>
    %c7_103 = arith.constant 7 : index
    %c0_104 = arith.constant 0 : index
    %c0_105 = arith.constant 0 : index
    %330 = vector.load %arg1[%c7_103, %c0_104, %c0_105] : memref<8x2x32xf32, #tpu.memory_space<vmem>>, vector<1x2x32xf32>
    %331 = vector.shape_cast %330 : vector<1x2x32xf32> to vector<2x32xf32>
    %cst_106 = arith.constant dense<0.000000e+00> : vector<2x32xf32>
    %332 = tpu.matmul %300, %1, %cst_106 {dimension_numbers = #tpu.dot_dimension_numbers<[1], [0], [0], [1], [0, 0, 1, 1], [], []>} : vector<2x32xf32>, vector<32x32xf32>, vector<2x32xf32> -> vector<2x32xf32>
    %333 = arith.addf %331, %332 : vector<2x32xf32>
    %334 = math.tanh %333 : vector<2x32xf32>
    %335 = vector.extract_strided_slice %329 {offsets = [0, 32], sizes = [2, 32], strides = [1, 1]} : vector<2x64xf32> to vector<2x32xf32>
    %336 = vector.broadcast %289 : vector<2x1xf32> to vector<2x8xf32>
    %337 = vector.broadcast %7 : vector<1x8xf32> to vector<2x8xf32>
    %338 = arith.mulf %336, %337 : vector<2x8xf32>
    %339 = vector.broadcast %8 : vector<1x8xf32> to vector<2x8xf32>
    %340 = arith.addf %338, %339 : vector<2x8xf32>
    %341 = vector.broadcast %9 : vector<1x8xf32> to vector<2x8xf32>
    %342 = arith.mulf %340, %341 : vector<2x8xf32>
    %cst_107 = arith.constant dense<0.000000e+00> : vector<2xf32>
    %343 = vector.multi_reduction <add>, %342, %cst_107 [1] : vector<2x8xf32> to vector<2xf32>
    %344 = vector.shape_cast %343 : vector<2xf32> to vector<2x1xf32>
    %345 = vector.broadcast %11 : vector<1x1xf32> to vector<2x1xf32>
    %346 = arith.addf %344, %345 : vector<2x1xf32>
    %347 = arith.negf %346 : vector<2x1xf32>
    %348 = math.exp %347 : vector<2x1xf32>
    %cst_108 = arith.constant 1.000000e+00 : f32
    %349 = vector.broadcast %cst_108 : f32 to vector<2x1xf32>
    %350 = arith.addf %349, %348 : vector<2x1xf32>
    %351 = arith.divf %349, %350 : vector<2x1xf32>
    %352 = vector.broadcast %351 : vector<2x1xf32> to vector<2x32xf32>
    %353 = arith.mulf %352, %334 : vector<2x32xf32>
    %cst_109 = arith.constant 1.000000e+00 : f32
    %354 = vector.broadcast %cst_109 : f32 to vector<2x1xf32>
    %355 = arith.subf %354, %351 : vector<2x1xf32>
    %356 = vector.broadcast %355 : vector<2x1xf32> to vector<2x32xf32>
    %357 = arith.mulf %356, %335 : vector<2x32xf32>
    %358 = arith.addf %353, %357 : vector<2x32xf32>
    %359 = tpu.concatenate %27, %38, %49, %128, %202, %236, %324, %358 in 0 : vector<2x32xf32>, vector<2x32xf32>, vector<2x32xf32>, vector<2x32xf32>, vector<2x32xf32>, vector<2x32xf32>, vector<2x32xf32>, vector<2x32xf32> -> vector<16x32xf32>
    %c0_110 = arith.constant 0 : index
    %c0_111 = arith.constant 0 : index
    %360 = vector.load %arg5[%c0_110, %c0_111] : memref<33x32xf32, #tpu.memory_space<vmem>>, vector<32x32xf32>
    %c32_112 = arith.constant 32 : index
    %c0_113 = arith.constant 0 : index
    %361 = vector.load %arg5[%c32_112, %c0_113] : memref<33x32xf32, #tpu.memory_space<vmem>>, vector<1x32xf32>
    %cst_114 = arith.constant dense<0.000000e+00> : vector<16x32xf32>
    %362 = tpu.matmul %359, %360, %cst_114 {dimension_numbers = #tpu.dot_dimension_numbers<[1], [0], [0], [1], [0, 0, 1, 1], [], []>} : vector<16x32xf32>, vector<32x32xf32>, vector<16x32xf32> -> vector<16x32xf32>
    %363 = vector.broadcast %361 : vector<1x32xf32> to vector<16x32xf32>
    %364 = arith.addf %362, %363 : vector<16x32xf32>
    %c0_115 = arith.constant 0 : index
    %c0_116 = arith.constant 0 : index
    %365 = vector.load %arg6[%c0_115, %c0_116] : memref<16x32xf32, #tpu.memory_space<vmem>>, vector<16x32xf32>
    tpu.vector_store %arg6[%c0_115, %c0_116], %364 {strides = array<i32>} : memref<16x32xf32, #tpu.memory_space<vmem>>, vector<16x32xf32>,
    %366 = vector.extract_strided_slice %329 {offsets = [0, 32], sizes = [2, 32], strides = [1, 1]} : vector<2x64xf32> to vector<2x32xf32>
    %c0_117 = arith.constant 0 : index
    %c0_118 = arith.constant 0 : index
    %c0_119 = arith.constant 0 : index
    %367 = vector.load %arg7[%c0_117, %c0_118, %c0_119] : memref<3x2x32xf32, #tpu.memory_space<vmem>>, vector<1x2x32xf32>
    %368 = vector.shape_cast %367 : vector<1x2x32xf32> to vector<2x32xf32>
    %369 = vector.shape_cast %366 : vector<2x32xf32> to vector<1x2x32xf32>
    tpu.vector_store %arg7[%c0_117, %c0_118, %c0_119], %369 {strides = array<i32>} : memref<3x2x32xf32, #tpu.memory_space<vmem>>, vector<1x2x32xf32>,
    %370 = vector.extract_strided_slice %329 {offsets = [0, 0], sizes = [2, 32], strides = [1, 1]} : vector<2x64xf32> to vector<2x32xf32>
    %c1_120 = arith.constant 1 : index
    %c0_121 = arith.constant 0 : index
    %c0_122 = arith.constant 0 : index
    %371 = vector.load %arg7[%c1_120, %c0_121, %c0_122] : memref<3x2x32xf32, #tpu.memory_space<vmem>>, vector<1x2x32xf32>
    %372 = vector.shape_cast %371 : vector<1x2x32xf32> to vector<2x32xf32>
    %373 = vector.shape_cast %370 : vector<2x32xf32> to vector<1x2x32xf32>
    tpu.vector_store %arg7[%c1_120, %c0_121, %c0_122], %373 {strides = array<i32>} : memref<3x2x32xf32, #tpu.memory_space<vmem>>, vector<1x2x32xf32>,
    %c2_123 = arith.constant 2 : index
    %c0_124 = arith.constant 0 : index
    %c0_125 = arith.constant 0 : index
    %374 = vector.load %arg7[%c2_123, %c0_124, %c0_125] : memref<3x2x32xf32, #tpu.memory_space<vmem>>, vector<1x2x32xf32>
    %375 = vector.shape_cast %374 : vector<1x2x32xf32> to vector<2x32xf32>
    %376 = vector.shape_cast %334 : vector<2x32xf32> to vector<1x2x32xf32>
    tpu.vector_store %arg7[%c2_123, %c0_124, %c0_125], %376 {strides = array<i32>} : memref<3x2x32xf32, #tpu.memory_space<vmem>>, vector<1x2x32xf32>,
    return
  }
}

</mosaic_0001>

<llo_original>
// kernel: fwd.1
$region0: #{fwd.1}
  #allocation0 [shape = 'u32[]', space=smem, size = 0x4, offset = 0x4, fixed_abs, tag = 'smem constant byte address 0x4 - core index']
  #allocation1 [shape = 'u32[144,128]{1,0:T(1,128)}', space=vmem, size = 0x12000, scoped, tag = 'internal scratch']
  %s0 = inlined_call_operand.vmem [shape: f32[8,2,64], index: 0, kind: input, shape index: {}]
  %s1 = inlined_call_operand.vmem [shape: f32[8,2,32], index: 1, kind: input, shape index: {}]
  %s2 = inlined_call_operand.vmem [shape: f32[64,64], index: 2, kind: input, shape index: {}]
  %s3 = inlined_call_operand.vmem [shape: f32[32,32], index: 3, kind: input, shape index: {}]
  %s4 = inlined_call_operand.vmem [shape: f32[40,8], index: 4, kind: input, shape index: {}]
  %s5 = inlined_call_operand.vmem [shape: f32[33,32], index: 5, kind: input, shape index: {}]
  %s6 = inlined_call_operand.vmem [shape: f32[16,32], index: 6, kind: output, shape index: {0}]
  %s7 = inlined_call_operand.vmem [shape: f32[3,2,32], index: 7, kind: output, shape index: {1}]
  %8 = xla_tuple %s6, %s7
  %s9 = sld [smem:[#allocation0]]
  $region42: #{fwd.1} parent=0
    _
  %s11 = ssub.s32 1, %s9
  %s12 = scalar_select 0, %s11, %s9
  // Predicated region
  $region2: #{fwd.1} parent=0 // pred_check
    _
  $region3: #{fwd.1} parent=0 // pred_check_branch
    %14 = sbr.rel (0) target = $region5
  $region4: #{fwd.1} parent=0 // pred_region
    _
  $region5: #{fwd.1} parent=0 // pred_fallthru
    _
  // Predicated region
  $region6: #{fwd.1} parent=0 // pred_check
    _
  $region7: #{fwd.1} parent=0 // pred_check_branch
    %16 = sbr.rel (0) target = $region9
  $region8: #{fwd.1} parent=0 // pred_region
    _
  $region9: #{fwd.1} parent=0 // pred_fallthru
    _
  // Predicated region
  $region10: #{fwd.1} parent=0 // pred_check
    _
  $region11: #{fwd.1} parent=0 // pred_check_branch
    %18 = sbr.rel (0) target = $region13
  $region12: #{fwd.1} parent=0 // pred_region
    _
  $region13: #{fwd.1} parent=0 // pred_fallthru
    _
  // Predicated region
  $region14: #{fwd.1} parent=0 // pred_check
    _
  $region15: #{fwd.1} parent=0 // pred_check_branch
    %20 = sbr.rel (0) target = $region17
  $region16: #{fwd.1} parent=0 // pred_region
    _
  $region17: #{fwd.1} parent=0 // pred_fallthru
    _
  // Predicated region
  $region18: #{fwd.1} parent=0 // pred_check
    _
  $region19: #{fwd.1} parent=0 // pred_check_branch
    %22 = sbr.rel (0) target = $region21
  $region20: #{fwd.1} parent=0 // pred_region
    _
  $region21: #{fwd.1} parent=0 // pred_fallthru
    _
  // Predicated region
  $region22: #{fwd.1} parent=0 // pred_check
    _
  $region23: #{fwd.1} parent=0 // pred_check_branch
    %24 = sbr.rel (0) target = $region25
  $region24: #{fwd.1} parent=0 // pred_region
    _
  $region25: #{fwd.1} parent=0 // pred_fallthru
    _
  %v25 = vld [vmem:[%s2] sm:$0xff]
  %v26 = vld [vmem:[%s2 + $0x8] sm:$0xff]
  %v27 = vld [vmem:[%s2 + $0x10] sm:$0xff]
  %v28 = vld [vmem:[%s2 + $0x18] sm:$0xff]
  %v29 = vld [vmem:[%s2 + $0x20] sm:$0xff]
  %v30 = vld [vmem:[%s2 + $0x28] sm:$0xff]
  %v31 = vld [vmem:[%s2 + $0x30] sm:$0xff]
  %v32 = vld [vmem:[%s2 + $0x38] sm:$0xff]
  %v33 = vld [vmem:[%s3] sm:$0xff]
  %v34 = vld [vmem:[%s3 + $0x8] sm:$0xff]
  %v35 = vld [vmem:[%s3 + $0x10] sm:$0xff]
  %v36 = vld [vmem:[%s3 + $0x18] sm:$0xff]
  %v37 = vld [vmem:[%s4] sm:$0xff]
  %v38 = vld [vmem:[%s4 + $0x8] sm:$0xff]
  %v39 = vld [vmem:[%s4 + $0x10] sm:$0xff]
  %v40 = vld [vmem:[%s4 + $0x18] sm:$0xff]
  %v41 = vld [vmem:[%s4 + $0x20] sm:$0xff]
  %v42 = vlaneseq
  %v43 = vshrl.u32 %v42, 7
  %v44 = vlaneseq
  %v45 = vand.u32 %v44, 127
  %v46 = vld [vmem:[%s0] sm:$0x3]
  %vm47 = vcmask 523264
  %v49 = vsel %vm47, 0.0, 0
  %51 = vmatprep.subr.mxu0 0.0
  %52 = vmatpush1.msra.mxu0 0.0
  %53 = vmatprep.subr.mxu0 0.0
  %54 = vmatpush1.msra.mxu0 0.0
  %55 = vmatprep.subr.mxu0 0.0
  %56 = vmatpush1.msra.mxu0 0.0
  %57 = vmatprep.subr.mxu0 0.0
  %58 = vmatpush1.msra.mxu0 0.0
  %59 = vmatprep.subr.mxu0 0.0
  %60 = vmatpush1.msra.mxu0 0.0
  %61 = vmatprep.subr.mxu0 0.0
  %62 = vmatpush1.msra.mxu0 0.0
  %63 = vmatprep.subr.mxu0 0.0
  %64 = vmatpush1.msra.mxu0 0.0
  %65 = vmatprep.subr.mxu0 0.0
  %66 = vmatpush1.msra.mxu0 0.0
  %67 = vmatprep.subr.mxu0 0.0
  %68 = vmatpush1.msra.mxu0 %v32
  %69 = vmatprep.subr.mxu0 0.0
  %70 = vmatpush1.msra.mxu0 %v31
  %71 = vmatprep.subr.mxu0 0.0
  %72 = vmatpush1.msra.mxu0 %v30
  %73 = vmatprep.subr.mxu0 0.0
  %74 = vmatpush1.msra.mxu0 %v29
  %75 = vmatprep.subr.mxu0 0.0
  %76 = vmatpush1.msra.mxu0 %v28
  %77 = vmatprep.subr.mxu0 0.0
  %78 = vmatpush1.msra.mxu0 %v27
  %79 = vmatprep.subr.mxu0 0.0
  %80 = vmatpush1.msra.mxu0 %v26
  %81 = vmatprep.subr.mxu0 0.0
  %82 = vmatpush1.msra.mxu0 %v25
  %83 = vmatprep.subr.mxu0 0.0
  %84 = vmatpush2.msra.mxu0 0.0
  %85 = vmatprep.subr.mxu0 0.0
  %86 = vmatpush2.msra.mxu0 0.0
  %87 = vmatprep.subr.mxu0 0.0
  %88 = vmatpush2.msra.mxu0 0.0
  %89 = vmatprep.subr.mxu0 0.0
  %90 = vmatpush2.msra.mxu0 0.0
  %91 = vmatprep.subr.mxu0 0.0
  %92 = vmatpush2.msra.mxu0 0.0
  %93 = vmatprep.subr.mxu0 0.0
  %94 = vmatpush2.msra.mxu0 0.0
  %95 = vmatprep.subr.mxu0 0.0
  %96 = vmatpush2.msra.mxu0 0.0
  %97 = vmatprep.subr.mxu0 0.0
  %98 = vmatpush2.msra.mxu0 0.0
  %99 = vmatprep.subr.mxu0 0.0
  %100 = vmatpush2.msra.mxu0 0.0
  %101 = vmatprep.subr.mxu0 0.0
  %102 = vmatpush2.msra.mxu0 0.0
  %103 = vmatprep.subr.mxu0 0.0
  %104 = vmatpush2.msra.mxu0 0.0
  %105 = vmatprep.subr.mxu0 0.0
  %106 = vmatpush2.msra.mxu0 0.0
  %107 = vmatprep.subr.mxu0 0.0
  %108 = vmatpush2.msra.mxu0 0.0
  %109 = vmatprep.subr.mxu0 0.0
  %110 = vmatpush2.msra.mxu0 0.0
  %111 = vmatprep.subr.mxu0 0.0
  %112 = vmatpush2.msra.mxu0 0.0
  %113 = vmatprep.subr.mxu0 0.0
  %114 = vmatpush2.msra.mxu0 0.0
  %115 = vmatprep.mubr.f32.mxu0 0.0
  %116 = vmatmul.mubr.f32.gmra.mxu0 %v49
  %v117 = vpop.f32.mrf.mxu0
  %v118 = vadd.f32 0.0, %v117
  %v119 = vpop.f32.mrf.mxu0
  %120 = vdwg.mxu0
  %v121 = vadd.f32 %v46, %v118
  %v122 = vtanh.pop %v121
  %v123 = vld [vmem:[%s1] sm:$0x3]
  %vm124 = vcmask 261120
  %v125 = vsel %vm124, 0.0, 0
  %127 = vmatprep.subr.mxu0 0.0
  %128 = vmatpush1.msra.mxu0 0.0
  %129 = vmatprep.subr.mxu0 0.0
  %130 = vmatpush1.msra.mxu0 0.0
  %131 = vmatprep.subr.mxu0 0.0
  %132 = vmatpush1.msra.mxu0 0.0
  %133 = vmatprep.subr.mxu0 0.0
  %134 = vmatpush1.msra.mxu0 0.0
  %135 = vmatprep.subr.mxu0 0.0
  %136 = vmatpush1.msra.mxu0 0.0
  %137 = vmatprep.subr.mxu0 0.0
  %138 = vmatpush1.msra.mxu0 0.0
  %139 = vmatprep.subr.mxu0 0.0
  %140 = vmatpush1.msra.mxu0 0.0
  %141 = vmatprep.subr.mxu0 0.0
  %142 = vmatpush1.msra.mxu0 0.0
  %143 = vmatprep.subr.mxu0 0.0
  %144 = vmatpush1.msra.mxu0 0.0
  %145 = vmatprep.subr.mxu0 0.0
  %146 = vmatpush1.msra.mxu0 0.0
  %147 = vmatprep.subr.mxu0 0.0
  %148 = vmatpush1.msra.mxu0 0.0
  %149 = vmatprep.subr.mxu0 0.0
  %150 = vmatpush1.msra.mxu0 0.0
  %151 = vmatprep.subr.mxu0 0.0
  %152 = vmatpush1.msra.mxu0 %v36
  %153 = vmatprep.subr.mxu0 0.0
  %154 = vmatpush1.msra.mxu0 %v35
  %155 = vmatprep.subr.mxu0 0.0
  %156 = vmatpush1.msra.mxu0 %v34
  %157 = vmatprep.subr.mxu0 0.0
  %158 = vmatpush1.msra.mxu0 %v33
  %159 = vmatprep.subr.mxu0 0.0
  %160 = vmatpush2.msra.mxu0 0.0
  %161 = vmatprep.subr.mxu0 0.0
  %162 = vmatpush2.msra.mxu0 0.0
  %163 = vmatprep.subr.mxu0 0.0
  %164 = vmatpush2.msra.mxu0 0.0
  %165 = vmatprep.subr.mxu0 0.0
  %166 = vmatpush2.msra.mxu0 0.0
  %167 = vmatprep.subr.mxu0 0.0
  %168 = vmatpush2.msra.mxu0 0.0
  %169 = vmatprep.subr.mxu0 0.0
  %170 = vmatpush2.msra.mxu0 0.0
  %171 = vmatprep.subr.mxu0 0.0
  %172 = vmatpush2.msra.mxu0 0.0
  %173 = vmatprep.subr.mxu0 0.0
  %174 = vmatpush2.msra.mxu0 0.0
  %175 = vmatprep.subr.mxu0 0.0
  %176 = vmatpush2.msra.mxu0 0.0
  %177 = vmatprep.subr.mxu0 0.0
  %178 = vmatpush2.msra.mxu0 0.0
  %179 = vmatprep.subr.mxu0 0.0
  %180 = vmatpush2.msra.mxu0 0.0
  %181 = vmatprep.subr.mxu0 0.0
  %182 = vmatpush2.msra.mxu0 0.0
  %183 = vmatprep.subr.mxu0 0.0
  %184 = vmatpush2.msra.mxu0 0.0
  %185 = vmatprep.subr.mxu0 0.0
  %186 = vmatpush2.msra.mxu0 0.0
  %187 = vmatprep.subr.mxu0 0.0
  %188 = vmatpush2.msra.mxu0 0.0
  %189 = vmatprep.subr.mxu0 0.0
  %190 = vmatpush2.msra.mxu0 0.0
  %191 = vmatprep.mubr.f32.mxu0 0.0
  %192 = vmatmul.mubr.f32.gmra.mxu0 %v125
  %v193 = vpop.f32.mrf.mxu0
  %v194 = vadd.f32 0.0, %v193
  %v195 = vpop.f32.mrf.mxu0
  %196 = vdwg.mxu0
  %v197 = vadd.f32 %v123, %v194
  %v198 = vtanh.pop %v197
  %s199 = scalar_lea.vmem %s0, 2
  %v200 = vld [vmem:[%s199] sm:$0x3]
  %v202 = vsel %vm47, %v122, 0
  %204 = vmatprep.subr.mxu0 0.0
  %205 = vmatpush1.msra.mxu0 0.0
  %206 = vmatprep.subr.mxu0 0.0
  %207 = vmatpush1.msra.mxu0 0.0
  %208 = vmatprep.subr.mxu0 0.0
  %209 = vmatpush1.msra.mxu0 0.0
  %210 = vmatprep.subr.mxu0 0.0
  %211 = vmatpush1.msra.mxu0 0.0
  %212 = vmatprep.subr.mxu0 0.0
  %213 = vmatpush1.msra.mxu0 0.0
  %214 = vmatprep.subr.mxu0 0.0
  %215 = vmatpush1.msra.mxu0 0.0
  %216 = vmatprep.subr.mxu0 0.0
  %217 = vmatpush1.msra.mxu0 0.0
  %218 = vmatprep.subr.mxu0 0.0
  %219 = vmatpush1.msra.mxu0 0.0
  %220 = vmatprep.subr.mxu0 0.0
  %221 = vmatpush1.msra.mxu0 %v32
  %222 = vmatprep.subr.mxu0 0.0
  %223 = vmatpush1.msra.mxu0 %v31
  %224 = vmatprep.subr.mxu0 0.0
  %225 = vmatpush1.msra.mxu0 %v30
  %226 = vmatprep.subr.mxu0 0.0
  %227 = vmatpush1.msra.mxu0 %v29
  %228 = vmatprep.subr.mxu0 0.0
  %229 = vmatpush1.msra.mxu0 %v28
  %230 = vmatprep.subr.mxu0 0.0
  %231 = vmatpush1.msra.mxu0 %v27
  %232 = vmatprep.subr.mxu0 0.0
  %233 = vmatpush1.msra.mxu0 %v26
  %234 = vmatprep.subr.mxu0 0.0
  %235 = vmatpush1.msra.mxu0 %v25
  %236 = vmatprep.subr.mxu0 0.0
  %237 = vmatpush2.msra.mxu0 0.0
  %238 = vmatprep.subr.mxu0 0.0
  %239 = vmatpush2.msra.mxu0 0.0
  %240 = vmatprep.subr.mxu0 0.0
  %241 = vmatpush2.msra.mxu0 0.0
  %242 = vmatprep.subr.mxu0 0.0
  %243 = vmatpush2.msra.mxu0 0.0
  %244 = vmatprep.subr.mxu0 0.0
  %245 = vmatpush2.msra.mxu0 0.0
  %246 = vmatprep.subr.mxu0 0.0
  %247 = vmatpush2.msra.mxu0 0.0
  %248 = vmatprep.subr.mxu0 0.0
  %249 = vmatpush2.msra.mxu0 0.0
  %250 = vmatprep.subr.mxu0 0.0
  %251 = vmatpush2.msra.mxu0 0.0
  %252 = vmatprep.subr.mxu0 0.0
  %253 = vmatpush2.msra.mxu0 0.0
  %254 = vmatprep.subr.mxu0 0.0
  %255 = vmatpush2.msra.mxu0 0.0
  %256 = vmatprep.subr.mxu0 0.0
  %257 = vmatpush2.msra.mxu0 0.0
  %258 = vmatprep.subr.mxu0 0.0
  %259 = vmatpush2.msra.mxu0 0.0
  %260 = vmatprep.subr.mxu0 0.0
  %261 = vmatpush2.msra.mxu0 0.0
  %262 = vmatprep.subr.mxu0 0.0
  %263 = vmatpush2.msra.mxu0 0.0
  %264 = vmatprep.subr.mxu0 0.0
  %265 = vmatpush2.msra.mxu0 0.0
  %266 = vmatprep.subr.mxu0 0.0
  %267 = vmatpush2.msra.mxu0 0.0
  %268 = vmatprep.mubr.f32.mxu0 0.0
  %269 = vmatmul.mubr.f32.gmra.mxu0 %v202
  %v270 = vpop.f32.mrf.mxu0
  %v271 = vadd.f32 0.0, %v270
  %v272 = vpop.f32.mrf.mxu0
  %273 = vdwg.mxu0
  %v274 = vadd.f32 %v200, %v271
  %v275 = vtanh.pop %v274
  %s276 = scalar_lea.vmem %s1, 2
  %v277 = vld [vmem:[%s276] sm:$0x3]
  %v279 = vsel %vm124, %v198, 0
  %281 = vmatprep.subr.mxu0 0.0
  %282 = vmatpush1.msra.mxu0 0.0
  %283 = vmatprep.subr.mxu0 0.0
  %284 = vmatpush1.msra.mxu0 0.0
  %285 = vmatprep.subr.mxu0 0.0
  %286 = vmatpush1.msra.mxu0 0.0
  %287 = vmatprep.subr.mxu0 0.0
  %288 = vmatpush1.msra.mxu0 0.0
  %289 = vmatprep.subr.mxu0 0.0
  %290 = vmatpush1.msra.mxu0 0.0
  %291 = vmatprep.subr.mxu0 0.0
  %292 = vmatpush1.msra.mxu0 0.0
  %293 = vmatprep.subr.mxu0 0.0
  %294 = vmatpush1.msra.mxu0 0.0
  %295 = vmatprep.subr.mxu0 0.0
  %296 = vmatpush1.msra.mxu0 0.0
  %297 = vmatprep.subr.mxu0 0.0
  %298 = vmatpush1.msra.mxu0 0.0
  %299 = vmatprep.subr.mxu0 0.0
  %300 = vmatpush1.msra.mxu0 0.0
  %301 = vmatprep.subr.mxu0 0.0
  %302 = vmatpush1.msra.mxu0 0.0
  %303 = vmatprep.subr.mxu0 0.0
  %304 = vmatpush1.msra.mxu0 0.0
  %305 = vmatprep.subr.mxu0 0.0
  %306 = vmatpush1.msra.mxu0 %v36
  %307 = vmatprep.subr.mxu0 0.0
  %308 = vmatpush1.msra.mxu0 %v35
  %309 = vmatprep.subr.mxu0 0.0
  %310 = vmatpush1.msra.mxu0 %v34
  %311 = vmatprep.subr.mxu0 0.0
  %312 = vmatpush1.msra.mxu0 %v33
  %313 = vmatprep.subr.mxu0 0.0
  %314 = vmatpush2.msra.mxu0 0.0
  %315 = vmatprep.subr.mxu0 0.0
  %316 = vmatpush2.msra.mxu0 0.0
  %317 = vmatprep.subr.mxu0 0.0
  %318 = vmatpush2.msra.mxu0 0.0
  %319 = vmatprep.subr.mxu0 0.0
  %320 = vmatpush2.msra.mxu0 0.0
  %321 = vmatprep.subr.mxu0 0.0
  %322 = vmatpush2.msra.mxu0 0.0
  %323 = vmatprep.subr.mxu0 0.0
  %324 = vmatpush2.msra.mxu0 0.0
  %325 = vmatprep.subr.mxu0 0.0
  %326 = vmatpush2.msra.mxu0 0.0
  %327 = vmatprep.subr.mxu0 0.0
  %328 = vmatpush2.msra.mxu0 0.0
  %329 = vmatprep.subr.mxu0 0.0
  %330 = vmatpush2.msra.mxu0 0.0
  %331 = vmatprep.subr.mxu0 0.0
  %332 = vmatpush2.msra.mxu0 0.0
  %333 = vmatprep.subr.mxu0 0.0
  %334 = vmatpush2.msra.mxu0 0.0
  %335 = vmatprep.subr.mxu0 0.0
  %336 = vmatpush2.msra.mxu0 0.0
  %337 = vmatprep.subr.mxu0 0.0
  %338 = vmatpush2.msra.mxu0 0.0
  %339 = vmatprep.subr.mxu0 0.0
  %340 = vmatpush2.msra.mxu0 0.0
  %341 = vmatprep.subr.mxu0 0.0
  %342 = vmatpush2.msra.mxu0 0.0
  %343 = vmatprep.subr.mxu0 0.0
  %344 = vmatpush2.msra.mxu0 0.0
  %345 = vmatprep.mubr.f32.mxu0 0.0
  %346 = vmatmul.mubr.f32.gmra.mxu0 %v279
  %v347 = vpop.f32.mrf.mxu0
  %v348 = vadd.f32 0.0, %v347
  %v349 = vpop.f32.mrf.mxu0
  %350 = vdwg.mxu0
  %v351 = vadd.f32 %v277, %v348
  %v352 = vtanh.pop %v351
  %s353 = scalar_lea.vmem %s0, 4
  %v354 = vld [vmem:[%s353] sm:$0x3]
  %v356 = vsel %vm47, %v275, 0
  %358 = vmatprep.subr.mxu0 0.0
  %359 = vmatpush1.msra.mxu0 0.0
  %360 = vmatprep.subr.mxu0 0.0
  %361 = vmatpush1.msra.mxu0 0.0
  %362 = vmatprep.subr.mxu0 0.0
  %363 = vmatpush1.msra.mxu0 0.0
  %364 = vmatprep.subr.mxu0 0.0
  %365 = vmatpush1.msra.mxu0 0.0
  %366 = vmatprep.subr.mxu0 0.0
  %367 = vmatpush1.msra.mxu0 0.0
  %368 = vmatprep.subr.mxu0 0.0
  %369 = vmatpush1.msra.mxu0 0.0
  %370 = vmatprep.subr.mxu0 0.0
  %371 = vmatpush1.msra.mxu0 0.0
  %372 = vmatprep.subr.mxu0 0.0
  %373 = vmatpush1.msra.mxu0 0.0
  %374 = vmatprep.subr.mxu0 0.0
  %375 = vmatpush1.msra.mxu0 %v32
  %376 = vmatprep.subr.mxu0 0.0
  %377 = vmatpush1.msra.mxu0 %v31
  %378 = vmatprep.subr.mxu0 0.0
  %379 = vmatpush1.msra.mxu0 %v30
  %380 = vmatprep.subr.mxu0 0.0
  %381 = vmatpush1.msra.mxu0 %v29
  %382 = vmatprep.subr.mxu0 0.0
  %383 = vmatpush1.msra.mxu0 %v28
  %384 = vmatprep.subr.mxu0 0.0
  %385 = vmatpush1.msra.mxu0 %v27
  %386 = vmatprep.subr.mxu0 0.0
  %387 = vmatpush1.msra.mxu0 %v26
  %388 = vmatprep.subr.mxu0 0.0
  %389 = vmatpush1.msra.mxu0 %v25
  %390 = vmatprep.subr.mxu0 0.0
  %391 = vmatpush2.msra.mxu0 0.0
  %392 = vmatprep.subr.mxu0 0.0
  %393 = vmatpush2.msra.mxu0 0.0
  %394 = vmatprep.subr.mxu0 0.0
  %395 = vmatpush2.msra.mxu0 0.0
  %396 = vmatprep.subr.mxu0 0.0
  %397 = vmatpush2.msra.mxu0 0.0
  %398 = vmatprep.subr.mxu0 0.0
  %399 = vmatpush2.msra.mxu0 0.0
  %400 = vmatprep.subr.mxu0 0.0
  %401 = vmatpush2.msra.mxu0 0.0
  %402 = vmatprep.subr.mxu0 0.0
  %403 = vmatpush2.msra.mxu0 0.0
  %404 = vmatprep.subr.mxu0 0.0
  %405 = vmatpush2.msra.mxu0 0.0
  %406 = vmatprep.subr.mxu0 0.0
  %407 = vmatpush2.msra.mxu0 0.0
  %408 = vmatprep.subr.mxu0 0.0
  %409 = vmatpush2.msra.mxu0 0.0
  %410 = vmatprep.subr.mxu0 0.0
  %411 = vmatpush2.msra.mxu0 0.0
  %412 = vmatprep.subr.mxu0 0.0
  %413 = vmatpush2.msra.mxu0 0.0
  %414 = vmatprep.subr.mxu0 0.0
  %415 = vmatpush2.msra.mxu0 0.0
  %416 = vmatprep.subr.mxu0 0.0
  %417 = vmatpush2.msra.mxu0 0.0
  %418 = vmatprep.subr.mxu0 0.0
  %419 = vmatpush2.msra.mxu0 0.0
  %420 = vmatprep.subr.mxu0 0.0
  %421 = vmatpush2.msra.mxu0 0.0
  %422 = vmatprep.mubr.f32.mxu0 0.0
  %423 = vmatmul.mubr.f32.gmra.mxu0 %v356
  %v424 = vpop.f32.mrf.mxu0
  %v425 = vadd.f32 0.0, %v424
  %v426 = vpop.f32.mrf.mxu0
  %427 = vdwg.mxu0
  %v428 = vadd.f32 %v354, %v425
  %v429 = vtanh.pop %v428
  %s430 = scalar_lea.vmem %s1, 4
  %v431 = vld [vmem:[%s430] sm:$0x3]
  %v433 = vsel %vm124, %v352, 0
  %435 = vmatprep.subr.mxu0 0.0
  %436 = vmatpush1.msra.mxu0 0.0
  %437 = vmatprep.subr.mxu0 0.0
  %438 = vmatpush1.msra.mxu0 0.0
  %439 = vmatprep.subr.mxu0 0.0
  %440 = vmatpush1.msra.mxu0 0.0
  %441 = vmatprep.subr.mxu0 0.0
  %442 = vmatpush1.msra.mxu0 0.0
  %443 = vmatprep.subr.mxu0 0.0
  %444 = vmatpush1.msra.mxu0 0.0
  %445 = vmatprep.subr.mxu0 0.0
  %446 = vmatpush1.msra.mxu0 0.0
  %447 = vmatprep.subr.mxu0 0.0
  %448 = vmatpush1.msra.mxu0 0.0
  %449 = vmatprep.subr.mxu0 0.0
  %450 = vmatpush1.msra.mxu0 0.0
  %451 = vmatprep.subr.mxu0 0.0
  %452 = vmatpush1.msra.mxu0 0.0
  %453 = vmatprep.subr.mxu0 0.0
  %454 = vmatpush1.msra.mxu0 0.0
  %455 = vmatprep.subr.mxu0 0.0
  %456 = vmatpush1.msra.mxu0 0.0
  %457 = vmatprep.subr.mxu0 0.0
  %458 = vmatpush1.msra.mxu0 0.0
  %459 = vmatprep.subr.mxu0 0.0
  %460 = vmatpush1.msra.mxu0 %v36
  %461 = vmatprep.subr.mxu0 0.0
  %462 = vmatpush1.msra.mxu0 %v35
  %463 = vmatprep.subr.mxu0 0.0
  %464 = vmatpush1.msra.mxu0 %v34
  %465 = vmatprep.subr.mxu0 0.0
  %466 = vmatpush1.msra.mxu0 %v33
  %467 = vmatprep.subr.mxu0 0.0
  %468 = vmatpush2.msra.mxu0 0.0
  %469 = vmatprep.subr.mxu0 0.0
  %470 = vmatpush2.msra.mxu0 0.0
  %471 = vmatprep.subr.mxu0 0.0
  %472 = vmatpush2.msra.mxu0 0.0
  %473 = vmatprep.subr.mxu0 0.0
  %474 = vmatpush2.msra.mxu0 0.0
  %475 = vmatprep.subr.mxu0 0.0
  %476 = vmatpush2.msra.mxu0 0.0
  %477 = vmatprep.subr.mxu0 0.0
  %478 = vmatpush2.msra.mxu0 0.0
  %479 = vmatprep.subr.mxu0 0.0
  %480 = vmatpush2.msra.mxu0 0.0
  %481 = vmatprep.subr.mxu0 0.0
  %482 = vmatpush2.msra.mxu0 0.0
  %483 = vmatprep.subr.mxu0 0.0
  %484 = vmatpush2.msra.mxu0 0.0
  %485 = vmatprep.subr.mxu0 0.0
  %486 = vmatpush2.msra.mxu0 0.0
  %487 = vmatprep.subr.mxu0 0.0
  %488 = vmatpush2.msra.mxu0 0.0
  %489 = vmatprep.subr.mxu0 0.0
  %490 = vmatpush2.msra.mxu0 0.0
  %491 = vmatprep.subr.mxu0 0.0
  %492 = vmatpush2.msra.mxu0 0.0
  %493 = vmatprep.subr.mxu0 0.0
  %494 = vmatpush2.msra.mxu0 0.0
  %495 = vmatprep.subr.mxu0 0.0
  %496 = vmatpush2.msra.mxu0 0.0
  %497 = vmatprep.subr.mxu0 0.0
  %498 = vmatpush2.msra.mxu0 0.0
  %499 = vmatprep.mubr.f32.mxu0 0.0
  %500 = vmatmul.mubr.f32.gmra.mxu0 %v433
  %v501 = vpop.f32.mrf.mxu0
  %v502 = vadd.f32 0.0, %v501
  %v503 = vpop.f32.mrf.mxu0
  %504 = vdwg.mxu0
  %v505 = vadd.f32 %v431, %v502
  %v506 = vtanh.pop %v505
  %s507 = scalar_lea.vmem %s0, 6
  %v508 = vld [vmem:[%s507] sm:$0x3]
  %v510 = vsel %vm47, %v429, 0
  %512 = vmatprep.subr.mxu0 0.0
  %513 = vmatpush1.msra.mxu0 0.0
  %514 = vmatprep.subr.mxu0 0.0
  %515 = vmatpush1.msra.mxu0 0.0
  %516 = vmatprep.subr.mxu0 0.0
  %517 = vmatpush1.msra.mxu0 0.0
  %518 = vmatprep.subr.mxu0 0.0
  %519 = vmatpush1.msra.mxu0 0.0
  %520 = vmatprep.subr.mxu0 0.0
  %521 = vmatpush1.msra.mxu0 0.0
  %522 = vmatprep.subr.mxu0 0.0
  %523 = vmatpush1.msra.mxu0 0.0
  %524 = vmatprep.subr.mxu0 0.0
  %525 = vmatpush1.msra.mxu0 0.0
  %526 = vmatprep.subr.mxu0 0.0
  %527 = vmatpush1.msra.mxu0 0.0
  %528 = vmatprep.subr.mxu0 0.0
  %529 = vmatpush1.msra.mxu0 %v32
  %530 = vmatprep.subr.mxu0 0.0
  %531 = vmatpush1.msra.mxu0 %v31
  %532 = vmatprep.subr.mxu0 0.0
  %533 = vmatpush1.msra.mxu0 %v30
  %534 = vmatprep.subr.mxu0 0.0
  %535 = vmatpush1.msra.mxu0 %v29
  %536 = vmatprep.subr.mxu0 0.0
  %537 = vmatpush1.msra.mxu0 %v28
  %538 = vmatprep.subr.mxu0 0.0
  %539 = vmatpush1.msra.mxu0 %v27
  %540 = vmatprep.subr.mxu0 0.0
  %541 = vmatpush1.msra.mxu0 %v26
  %542 = vmatprep.subr.mxu0 0.0
  %543 = vmatpush1.msra.mxu0 %v25
  %544 = vmatprep.subr.mxu0 0.0
  %545 = vmatpush2.msra.mxu0 0.0
  %546 = vmatprep.subr.mxu0 0.0
  %547 = vmatpush2.msra.mxu0 0.0
  %548 = vmatprep.subr.mxu0 0.0
  %549 = vmatpush2.msra.mxu0 0.0
  %550 = vmatprep.subr.mxu0 0.0
  %551 = vmatpush2.msra.mxu0 0.0
  %552 = vmatprep.subr.mxu0 0.0
  %553 = vmatpush2.msra.mxu0 0.0
  %554 = vmatprep.subr.mxu0 0.0
  %555 = vmatpush2.msra.mxu0 0.0
  %556 = vmatprep.subr.mxu0 0.0
  %557 = vmatpush2.msra.mxu0 0.0
  %558 = vmatprep.subr.mxu0 0.0
  %559 = vmatpush2.msra.mxu0 0.0
  %560 = vmatprep.subr.mxu0 0.0
  %561 = vmatpush2.msra.mxu0 0.0
  %562 = vmatprep.subr.mxu0 0.0
  %563 = vmatpush2.msra.mxu0 0.0
  %564 = vmatprep.subr.mxu0 0.0
  %565 = vmatpush2.msra.mxu0 0.0
  %566 = vmatprep.subr.mxu0 0.0
  %567 = vmatpush2.msra.mxu0 0.0
  %568 = vmatprep.subr.mxu0 0.0
  %569 = vmatpush2.msra.mxu0 0.0
  %570 = vmatprep.subr.mxu0 0.0
  %571 = vmatpush2.msra.mxu0 0.0
  %572 = vmatprep.subr.mxu0 0.0
  %573 = vmatpush2.msra.mxu0 0.0
  %574 = vmatprep.subr.mxu0 0.0
  %575 = vmatpush2.msra.mxu0 0.0
  %576 = vmatprep.mubr.f32.mxu0 0.0
  %577 = vmatmul.mubr.f32.gmra.mxu0 %v510
  %v578 = vpop.f32.mrf.mxu0
  %v579 = vadd.f32 0.0, %v578
  %v580 = vpop.f32.mrf.mxu0
  %581 = vdwg.mxu0
  %v582 = vadd.f32 %v508, %v579
  %v583 = vtanh.pop %v582
  %v584 = vmul.f32 %v41, 0.1
  %v586 = vsel %vm124, %v583, 0
  %588 = vmatprep.subr.mxu0 0.0
  %589 = vmatpush1.msra.mxu0 0.0
  %590 = vmatprep.subr.mxu0 0.0
  %591 = vmatpush1.msra.mxu0 0.0
  %592 = vmatprep.subr.mxu0 0.0
  %593 = vmatpush1.msra.mxu0 0.0
  %594 = vmatprep.subr.mxu0 0.0
  %595 = vmatpush1.msra.mxu0 0.0
  %596 = vmatprep.subr.mxu0 0.0
  %597 = vmatpush1.msra.mxu0 0.0
  %598 = vmatprep.subr.mxu0 0.0
  %599 = vmatpush1.msra.mxu0 0.0
  %600 = vmatprep.subr.mxu0 0.0
  %601 = vmatpush1.msra.mxu0 0.0
  %602 = vmatprep.subr.mxu0 0.0
  %603 = vmatpush1.msra.mxu0 0.0
  %604 = vmatprep.subr.mxu0 0.0
  %605 = vmatpush1.msra.mxu0 0.0
  %606 = vmatprep.subr.mxu0 0.0
  %607 = vmatpush1.msra.mxu0 0.0
  %608 = vmatprep.subr.mxu0 0.0
  %609 = vmatpush1.msra.mxu0 0.0
  %610 = vmatprep.subr.mxu0 0.0
  %611 = vmatpush1.msra.mxu0 0.0
  %612 = vmatprep.subr.mxu0 0.0
  %613 = vmatpush1.msra.mxu0 %v40
  %614 = vmatprep.subr.mxu0 0.0
  %615 = vmatpush1.msra.mxu0 %v39
  %616 = vmatprep.subr.mxu0 0.0
  %617 = vmatpush1.msra.mxu0 %v38
  %618 = vmatprep.subr.mxu0 0.0
  %619 = vmatpush1.msra.mxu0 %v37
  %620 = vmatprep.subr.mxu0 0.0
  %621 = vmatpush2.msra.mxu0 0.0
  %622 = vmatprep.subr.mxu0 0.0
  %623 = vmatpush2.msra.mxu0 0.0
  %624 = vmatprep.subr.mxu0 0.0
  %625 = vmatpush2.msra.mxu0 0.0
  %626 = vmatprep.subr.mxu0 0.0
  %627 = vmatpush2.msra.mxu0 0.0
  %628 = vmatprep.subr.mxu0 0.0
  %629 = vmatpush2.msra.mxu0 0.0
  %630 = vmatprep.subr.mxu0 0.0
  %631 = vmatpush2.msra.mxu0 0.0
  %632 = vmatprep.subr.mxu0 0.0
  %633 = vmatpush2.msra.mxu0 0.0
  %634 = vmatprep.subr.mxu0 0.0
  %635 = vmatpush2.msra.mxu0 0.0
  %636 = vmatprep.subr.mxu0 0.0
  %637 = vmatpush2.msra.mxu0 0.0
  %638 = vmatprep.subr.mxu0 0.0
  %639 = vmatpush2.msra.mxu0 0.0
  %640 = vmatprep.subr.mxu0 0.0
  %641 = vmatpush2.msra.mxu0 0.0
  %642 = vmatprep.subr.mxu0 0.0
  %643 = vmatpush2.msra.mxu0 0.0
  %644 = vmatprep.subr.mxu0 0.0
  %645 = vmatpush2.msra.mxu0 0.0
  %646 = vmatprep.subr.mxu0 0.0
  %647 = vmatpush2.msra.mxu0 0.0
  %648 = vmatprep.subr.mxu0 0.0
  %649 = vmatpush2.msra.mxu0 0.0
  %650 = vmatprep.subr.mxu0 0.0
  %651 = vmatpush2.msra.mxu0 0.0
  %652 = vmatprep.mubr.f32.mxu0 0.0
  %653 = vmatmul.mubr.f32.gmra.mxu0 %v586
  %v654 = vpop.f32.mrf.mxu0
  %v655 = vadd.f32 %v584, %v654
  %v656 = vpop.f32.mrf.mxu0
  %657 = vdwg.mxu0
  %v659 = vrot.slane %v41, 1
  %v661 = vadd.f32 %v655, %v659
  %v662 = vrot.slane %v41, 2
  %v664 = vmul.f32 %v661, %v662
  %vm665 = vcmask 57344
  %v666 = vsel %vm665, %v664, 0.0
  %667 = vadd.xlane.f32.xlu0 %v666
  %v668 = vpop.xlane.xlu0 %667
  %v669 = vrot.slane %v41, 6
  %v671 = vadd.f32 %v668, %v669
  %v672 = vtanh.pop %v671
  %v673 = vsub.f32 %v672, %v672
  %v674 = vmul.f32 %v673, 1.442695
  %v675 = vpow.pop %v674
  %v676 = vadd.f32 %v675, 0.0
  %v677 = vrcp.pop %v676
  %v678 = vmul.f32 %v675, %v677
  %680 = vset.pattern.permute.xlu0 0
  %681 = vperm.xlu0 %680, %v678
  %v682 = vpop.permute.xlu0 %681
  %v684 = vmul.f32 %v682, %v583
  %v685 = vadd.f32 %v684, 0.0
  %v686 = vmul.f32 %v678, 0.1
  %vm687 = vcmp.eq.s32.totalorder %v43, 0
  %v688 = vsel %vm687, 1, 0
  %vm689 = vcmp.eq.s32.totalorder %v688, 1
  %v690 = vlaneseq
  %v691 = vshrl.u32 %v690, 7
  %v692 = vsub.s32 0, %v691
  %v693 = vrot.slane %v685, %v692
  %v694 = vsel %vm689, %v693, %v506
  %v695 = vlaneseq
  %v696 = vshrl.u32 %v695, 7
  %v697 = vsub.s32 0, %v696
  %v698 = vrot.slane %v686, %v697
  %v699 = vsel %vm687, %v698, 0.0
  %vm700 = vcmp.lt.s32.totalorder %v45, 32
  %vm701 = vmand %vm689, %vm700
  %v702 = vsel %vm701, 0.0, %v583
  %s703 = scalar_lea.vmem %s1, 6
  %v704 = vld [vmem:[%s703] sm:$0x3]
  %v706 = vsel %vm124, %v694, 0
  %708 = vmatprep.subr.mxu0 0.0
  %709 = vmatpush1.msra.mxu0 0.0
  %710 = vmatprep.subr.mxu0 0.0
  %711 = vmatpush1.msra.mxu0 0.0
  %712 = vmatprep.subr.mxu0 0.0
  %713 = vmatpush1.msra.mxu0 0.0
  %714 = vmatprep.subr.mxu0 0.0
  %715 = vmatpush1.msra.mxu0 0.0
  %716 = vmatprep.subr.mxu0 0.0
  %717 = vmatpush1.msra.mxu0 0.0
  %718 = vmatprep.subr.mxu0 0.0
  %719 = vmatpush1.msra.mxu0 0.0
  %720 = vmatprep.subr.mxu0 0.0
  %721 = vmatpush1.msra.mxu0 0.0
  %722 = vmatprep.subr.mxu0 0.0
  %723 = vmatpush1.msra.mxu0 0.0
  %724 = vmatprep.subr.mxu0 0.0
  %725 = vmatpush1.msra.mxu0 0.0
  %726 = vmatprep.subr.mxu0 0.0
  %727 = vmatpush1.msra.mxu0 0.0
  %728 = vmatprep.subr.mxu0 0.0
  %729 = vmatpush1.msra.mxu0 0.0
  %730 = vmatprep.subr.mxu0 0.0
  %731 = vmatpush1.msra.mxu0 0.0
  %732 = vmatprep.subr.mxu0 0.0
  %733 = vmatpush1.msra.mxu0 %v36
  %734 = vmatprep.subr.mxu0 0.0
  %735 = vmatpush1.msra.mxu0 %v35
  %736 = vmatprep.subr.mxu0 0.0
  %737 = vmatpush1.msra.mxu0 %v34
  %738 = vmatprep.subr.mxu0 0.0
  %739 = vmatpush1.msra.mxu0 %v33
  %740 = vmatprep.subr.mxu0 0.0
  %741 = vmatpush2.msra.mxu0 0.0
  %742 = vmatprep.subr.mxu0 0.0
  %743 = vmatpush2.msra.mxu0 0.0
  %744 = vmatprep.subr.mxu0 0.0
  %745 = vmatpush2.msra.mxu0 0.0
  %746 = vmatprep.subr.mxu0 0.0
  %747 = vmatpush2.msra.mxu0 0.0
  %748 = vmatprep.subr.mxu0 0.0
  %749 = vmatpush2.msra.mxu0 0.0
  %750 = vmatprep.subr.mxu0 0.0
  %751 = vmatpush2.msra.mxu0 0.0
  %752 = vmatprep.subr.mxu0 0.0
  %753 = vmatpush2.msra.mxu0 0.0
  %754 = vmatprep.subr.mxu0 0.0
  %755 = vmatpush2.msra.mxu0 0.0
  %756 = vmatprep.subr.mxu0 0.0
  %757 = vmatpush2.msra.mxu0 0.0
  %758 = vmatprep.subr.mxu0 0.0
  %759 = vmatpush2.msra.mxu0 0.0
  %760 = vmatprep.subr.mxu0 0.0
  %761 = vmatpush2.msra.mxu0 0.0
  %762 = vmatprep.subr.mxu0 0.0
  %763 = vmatpush2.msra.mxu0 0.0
  %764 = vmatprep.subr.mxu0 0.0
  %765 = vmatpush2.msra.mxu0 0.0
  %766 = vmatprep.subr.mxu0 0.0
  %767 = vmatpush2.msra.mxu0 0.0
  %768 = vmatprep.subr.mxu0 0.0
  %769 = vmatpush2.msra.mxu0 0.0
  %770 = vmatprep.subr.mxu0 0.0
  %771 = vmatpush2.msra.mxu0 0.0
  %772 = vmatprep.mubr.f32.mxu0 0.0
  %773 = vmatmul.mubr.f32.gmra.mxu0 %v706
  %v774 = vpop.f32.mrf.mxu0
  %v775 = vadd.f32 0.0, %v774
  %v776 = vpop.f32.mrf.mxu0
  %777 = vdwg.mxu0
  %v778 = vadd.f32 %v704, %v775
  %v779 = vtanh.pop %v778
  %781 = vset.pattern.permute.xlu0 0
  %782 = vperm.xlu0 %781, %v699
  %v783 = vpop.permute.xlu0 %782
  %v785 = vlaneseq
  %v786 = vshrl.u32 %v785, 7
  %v787 = vsub.s32 3, %v786
  %v788 = vrot.slane %v41, %v787
  %v789 = vmul.f32 %v783, %v788
  %v790 = vlaneseq
  %v791 = vshrl.u32 %v790, 7
  %v792 = vsub.s32 4, %v791
  %v793 = vrot.slane %v41, %v792
  %v794 = vadd.f32 %v789, %v793
  %v795 = vlaneseq
  %v796 = vshrl.u32 %v795, 7
  %v797 = vsub.s32 5, %v796
  %v798 = vrot.slane %v41, %v797
  %v799 = vmul.f32 %v794, %v798
  %vm800 = vcmask 58368
  %v801 = vsel %vm800, %v799, 0.0
  %802 = vadd.xlane.f32.xlu0 %v801
  %v803 = vpop.xlane.xlu0 %802
  %v804 = vlaneseq
  %v805 = vshrl.u32 %v804, 7
  %v806 = vsub.s32 6, %v805
  %v807 = vrot.slane %v41, %v806
  %v808 = vadd.f32 %v803, %v807
  %v809 = vxor.u32 %v808, 2147483648
  %v810 = vmul.f32 %v809, 1.442695
  %v811 = vpow.pop %v810
  %v812 = vadd.f32 %v811, 1.0
  %v813 = vrcp.pop %v812
  %v814 = vmul.f32 1.0, %v813
  %816 = vset.pattern.permute.xlu0 1
  %817 = vperm.xlu0 %816, %v814
  %v818 = vpop.permute.xlu0 %817
  %v820 = vmul.f32 %v818, %v779
  %v821 = vsub.f32 1.0, %v814
  %823 = vset.pattern.permute.xlu0 1
  %824 = vperm.xlu0 %823, %v821
  %v825 = vpop.permute.xlu0 %824
  %v827 = vmul.f32 %v825, %v702
  %829 = vrot.lane.b32.xlu0 %v827, 96
  %v830 = vpop.permute.xlu0 %829
  %v832 = vadd.f32 %v820, %v830
  %834 = vrot.lane.b32.xlu0 %v702, 96
  %v835 = vpop.permute.xlu0 %834
  %v837 = vsel %vm689, %v832, %v835
  %s838 = scalar_lea.vmem %s0, 8
  %v839 = vld [vmem:[%s838] sm:$0x3]
  %v840 = vsel %vm47, %v702, 0
  %842 = vmatprep.subr.mxu0 0.0
  %843 = vmatpush1.msra.mxu0 0.0
  %844 = vmatprep.subr.mxu0 0.0
  %845 = vmatpush1.msra.mxu0 0.0
  %846 = vmatprep.subr.mxu0 0.0
  %847 = vmatpush1.msra.mxu0 0.0
  %848 = vmatprep.subr.mxu0 0.0
  %849 = vmatpush1.msra.mxu0 0.0
  %850 = vmatprep.subr.mxu0 0.0
  %851 = vmatpush1.msra.mxu0 0.0
  %852 = vmatprep.subr.mxu0 0.0
  %853 = vmatpush1.msra.mxu0 0.0
  %854 = vmatprep.subr.mxu0 0.0
  %855 = vmatpush1.msra.mxu0 0.0
  %856 = vmatprep.subr.mxu0 0.0
  %857 = vmatpush1.msra.mxu0 0.0
  %858 = vmatprep.subr.mxu0 0.0
  %859 = vmatpush1.msra.mxu0 %v32
  %860 = vmatprep.subr.mxu0 0.0
  %861 = vmatpush1.msra.mxu0 %v31
  %862 = vmatprep.subr.mxu0 0.0
  %863 = vmatpush1.msra.mxu0 %v30
  %864 = vmatprep.subr.mxu0 0.0
  %865 = vmatpush1.msra.mxu0 %v29
  %866 = vmatprep.subr.mxu0 0.0
  %867 = vmatpush1.msra.mxu0 %v28
  %868 = vmatprep.subr.mxu0 0.0
  %869 = vmatpush1.msra.mxu0 %v27
  %870 = vmatprep.subr.mxu0 0.0
  %871 = vmatpush1.msra.mxu0 %v26
  %872 = vmatprep.subr.mxu0 0.0
  %873 = vmatpush1.msra.mxu0 %v25
  %874 = vmatprep.subr.mxu0 0.0
  %875 = vmatpush2.msra.mxu0 0.0
  %876 = vmatprep.subr.mxu0 0.0
  %877 = vmatpush2.msra.mxu0 0.0
  %878 = vmatprep.subr.mxu0 0.0
  %879 = vmatpush2.msra.mxu0 0.0
  %880 = vmatprep.subr.mxu0 0.0
  %881 = vmatpush2.msra.mxu0 0.0
  %882 = vmatprep.subr.mxu0 0.0
  %883 = vmatpush2.msra.mxu0 0.0
  %884 = vmatprep.subr.mxu0 0.0
  %885 = vmatpush2.msra.mxu0 0.0
  %886 = vmatprep.subr.mxu0 0.0
  %887 = vmatpush2.msra.mxu0 0.0
  %888 = vmatprep.subr.mxu0 0.0
  %889 = vmatpush2.msra.mxu0 0.0
  %890 = vmatprep.subr.mxu0 0.0
  %891 = vmatpush2.msra.mxu0 0.0
  %892 = vmatprep.subr.mxu0 0.0
  %893 = vmatpush2.msra.mxu0 0.0
  %894 = vmatprep.subr.mxu0 0.0
  %895 = vmatpush2.msra.mxu0 0.0
  %896 = vmatprep.subr.mxu0 0.0
  %897 = vmatpush2.msra.mxu0 0.0
  %898 = vmatprep.subr.mxu0 0.0
  %899 = vmatpush2.msra.mxu0 0.0
  %900 = vmatprep.subr.mxu0 0.0
  %901 = vmatpush2.msra.mxu0 0.0
  %902 = vmatprep.subr.mxu0 0.0
  %903 = vmatpush2.msra.mxu0 0.0
  %904 = vmatprep.subr.mxu0 0.0
  %905 = vmatpush2.msra.mxu0 0.0
  %906 = vmatprep.mubr.f32.mxu0 0.0
  %907 = vmatmul.mubr.f32.gmra.mxu0 %v840
  %v908 = vpop.f32.mrf.mxu0
  %v909 = vadd.f32 0.0, %v908
  %v910 = vpop.f32.mrf.mxu0
  %911 = vdwg.mxu0
  %v912 = vadd.f32 %v839, %v909
  %v913 = vtanh.pop %v912
  %v914 = vmul.f32 %v41, 0.15
  %v916 = vrot.slane %v913, 1
  %v917 = vsel %vm124, %v916, 0
  %919 = vmatprep.subr.mxu0 0.0
  %920 = vmatpush1.msra.mxu0 0.0
  %921 = vmatprep.subr.mxu0 0.0
  %922 = vmatpush1.msra.mxu0 0.0
  %923 = vmatprep.subr.mxu0 0.0
  %924 = vmatpush1.msra.mxu0 0.0
  %925 = vmatprep.subr.mxu0 0.0
  %926 = vmatpush1.msra.mxu0 0.0
  %927 = vmatprep.subr.mxu0 0.0
  %928 = vmatpush1.msra.mxu0 0.0
  %929 = vmatprep.subr.mxu0 0.0
  %930 = vmatpush1.msra.mxu0 0.0
  %931 = vmatprep.subr.mxu0 0.0
  %932 = vmatpush1.msra.mxu0 0.0
  %933 = vmatprep.subr.mxu0 0.0
  %934 = vmatpush1.msra.mxu0 0.0
  %935 = vmatprep.subr.mxu0 0.0
  %936 = vmatpush1.msra.mxu0 0.0
  %937 = vmatprep.subr.mxu0 0.0
  %938 = vmatpush1.msra.mxu0 0.0
  %939 = vmatprep.subr.mxu0 0.0
  %940 = vmatpush1.msra.mxu0 0.0
  %941 = vmatprep.subr.mxu0 0.0
  %942 = vmatpush1.msra.mxu0 0.0
  %943 = vmatprep.subr.mxu0 0.0
  %944 = vmatpush1.msra.mxu0 %v40
  %945 = vmatprep.subr.mxu0 0.0
  %946 = vmatpush1.msra.mxu0 %v39
  %947 = vmatprep.subr.mxu0 0.0
  %948 = vmatpush1.msra.mxu0 %v38
  %949 = vmatprep.subr.mxu0 0.0
  %950 = vmatpush1.msra.mxu0 %v37
  %951 = vmatprep.subr.mxu0 0.0
  %952 = vmatpush2.msra.mxu0 0.0
  %953 = vmatprep.subr.mxu0 0.0
  %954 = vmatpush2.msra.mxu0 0.0
  %955 = vmatprep.subr.mxu0 0.0
  %956 = vmatpush2.msra.mxu0 0.0
  %957 = vmatprep.subr.mxu0 0.0
  %958 = vmatpush2.msra.mxu0 0.0
  %959 = vmatprep.subr.mxu0 0.0
  %960 = vmatpush2.msra.mxu0 0.0
  %961 = vmatprep.subr.mxu0 0.0
  %962 = vmatpush2.msra.mxu0 0.0
  %963 = vmatprep.subr.mxu0 0.0
  %964 = vmatpush2.msra.mxu0 0.0
  %965 = vmatprep.subr.mxu0 0.0
  %966 = vmatpush2.msra.mxu0 0.0
  %967 = vmatprep.subr.mxu0 0.0
  %968 = vmatpush2.msra.mxu0 0.0
  %969 = vmatprep.subr.mxu0 0.0
  %970 = vmatpush2.msra.mxu0 0.0
  %971 = vmatprep.subr.mxu0 0.0
  %972 = vmatpush2.msra.mxu0 0.0
  %973 = vmatprep.subr.mxu0 0.0
  %974 = vmatpush2.msra.mxu0 0.0
  %975 = vmatprep.subr.mxu0 0.0
  %976 = vmatpush2.msra.mxu0 0.0
  %977 = vmatprep.subr.mxu0 0.0
  %978 = vmatpush2.msra.mxu0 0.0
  %979 = vmatprep.subr.mxu0 0.0
  %980 = vmatpush2.msra.mxu0 0.0
  %981 = vmatprep.subr.mxu0 0.0
  %982 = vmatpush2.msra.mxu0 0.0
  %983 = vmatprep.mubr.f32.mxu0 0.0
  %984 = vmatmul.mubr.f32.gmra.mxu0 %v917
  %v985 = vpop.f32.mrf.mxu0
  %v986 = vadd.f32 %v914, %v985
  %v987 = vpop.f32.mrf.mxu0
  %988 = vdwg.mxu0
  %v989 = vadd.f32 %v986, %v659
  %v990 = vmul.f32 %v989, %v662
  %v991 = vsel %vm665, %v990, 0.0
  %992 = vadd.xlane.f32.xlu0 %v991
  %v993 = vpop.xlane.xlu0 %992
  %v994 = vadd.f32 %v993, %v669
  %v995 = vtanh.pop %v994
  %v996 = vsub.f32 %v995, %v995
  %v997 = vmul.f32 %v996, 1.442695
  %v998 = vpow.pop %v997
  %v999 = vadd.f32 %v998, 0.0
  %v1000 = vrcp.pop %v999
  %v1001 = vmul.f32 %v998, %v1000
  %1003 = vset.pattern.permute.xlu0 0
  %1004 = vperm.xlu0 %1003, %v1001
  %v1005 = vpop.permute.xlu0 %1004
  %v1008 = vmul.f32 %v1005, %v916
  %v1009 = vadd.f32 %v1008, 0.0
  %v1010 = vmul.f32 %v1001, 0.15
  %vm1011 = vcmp.eq.s32.totalorder %v43, 1
  %v1012 = vsel %vm1011, 1, 0
  %vm1013 = vcmp.eq.s32.totalorder %v1012, 1
  %v1014 = vlaneseq
  %v1015 = vshrl.u32 %v1014, 7
  %v1016 = vsub.s32 0, %v1015
  %v1017 = vrot.slane %v1009, %v1016
  %v1018 = vsel %vm1013, %v1017, %v779
  %v1019 = vlaneseq
  %v1020 = vshrl.u32 %v1019, 7
  %v1021 = vsub.s32 0, %v1020
  %v1022 = vrot.slane %v1010, %v1021
  %v1023 = vsel %vm1011, %v1022, %v699
  %vm1024 = vmand %vm1013, %vm700
  %v1025 = vsel %vm1024, 0.0, %v913
  %s1026 = scalar_lea.vmem %s1, 8
  %v1027 = vld [vmem:[%s1026] sm:$0x3]
  %v1029 = vsel %vm124, %v1018, 0
  %1031 = vmatprep.subr.mxu0 0.0
  %1032 = vmatpush1.msra.mxu0 0.0
  %1033 = vmatprep.subr.mxu0 0.0
  %1034 = vmatpush1.msra.mxu0 0.0
  %1035 = vmatprep.subr.mxu0 0.0
  %1036 = vmatpush1.msra.mxu0 0.0
  %1037 = vmatprep.subr.mxu0 0.0
  %1038 = vmatpush1.msra.mxu0 0.0
  %1039 = vmatprep.subr.mxu0 0.0
  %1040 = vmatpush1.msra.mxu0 0.0
  %1041 = vmatprep.subr.mxu0 0.0
  %1042 = vmatpush1.msra.mxu0 0.0
  %1043 = vmatprep.subr.mxu0 0.0
  %1044 = vmatpush1.msra.mxu0 0.0
  %1045 = vmatprep.subr.mxu0 0.0
  %1046 = vmatpush1.msra.mxu0 0.0
  %1047 = vmatprep.subr.mxu0 0.0
  %1048 = vmatpush1.msra.mxu0 0.0
  %1049 = vmatprep.subr.mxu0 0.0
  %1050 = vmatpush1.msra.mxu0 0.0
  %1051 = vmatprep.subr.mxu0 0.0
  %1052 = vmatpush1.msra.mxu0 0.0
  %1053 = vmatprep.subr.mxu0 0.0
  %1054 = vmatpush1.msra.mxu0 0.0
  %1055 = vmatprep.subr.mxu0 0.0
  %1056 = vmatpush1.msra.mxu0 %v36
  %1057 = vmatprep.subr.mxu0 0.0
  %1058 = vmatpush1.msra.mxu0 %v35
  %1059 = vmatprep.subr.mxu0 0.0
  %1060 = vmatpush1.msra.mxu0 %v34
  %1061 = vmatprep.subr.mxu0 0.0
  %1062 = vmatpush1.msra.mxu0 %v33
  %1063 = vmatprep.subr.mxu0 0.0
  %1064 = vmatpush2.msra.mxu0 0.0
  %1065 = vmatprep.subr.mxu0 0.0
  %1066 = vmatpush2.msra.mxu0 0.0
  %1067 = vmatprep.subr.mxu0 0.0
  %1068 = vmatpush2.msra.mxu0 0.0
  %1069 = vmatprep.subr.mxu0 0.0
  %1070 = vmatpush2.msra.mxu0 0.0
  %1071 = vmatprep.subr.mxu0 0.0
  %1072 = vmatpush2.msra.mxu0 0.0
  %1073 = vmatprep.subr.mxu0 0.0
  %1074 = vmatpush2.msra.mxu0 0.0
  %1075 = vmatprep.subr.mxu0 0.0
  %1076 = vmatpush2.msra.mxu0 0.0
  %1077 = vmatprep.subr.mxu0 0.0
  %1078 = vmatpush2.msra.mxu0 0.0
  %1079 = vmatprep.subr.mxu0 0.0
  %1080 = vmatpush2.msra.mxu0 0.0
  %1081 = vmatprep.subr.mxu0 0.0
  %1082 = vmatpush2.msra.mxu0 0.0
  %1083 = vmatprep.subr.mxu0 0.0
  %1084 = vmatpush2.msra.mxu0 0.0
  %1085 = vmatprep.subr.mxu0 0.0
  %1086 = vmatpush2.msra.mxu0 0.0
  %1087 = vmatprep.subr.mxu0 0.0
  %1088 = vmatpush2.msra.mxu0 0.0
  %1089 = vmatprep.subr.mxu0 0.0
  %1090 = vmatpush2.msra.mxu0 0.0
  %1091 = vmatprep.subr.mxu0 0.0
  %1092 = vmatpush2.msra.mxu0 0.0
  %1093 = vmatprep.subr.mxu0 0.0
  %1094 = vmatpush2.msra.mxu0 0.0
  %1095 = vmatprep.mubr.f32.mxu0 0.0
  %1096 = vmatmul.mubr.f32.gmra.mxu0 %v1029
  %v1097 = vpop.f32.mrf.mxu0
  %v1098 = vadd.f32 0.0, %v1097
  %v1099 = vpop.f32.mrf.mxu0
  %1100 = vdwg.mxu0
  %v1101 = vadd.f32 %v1027, %v1098
  %v1102 = vtanh.pop %v1101
  %1104 = vset.pattern.permute.xlu0 0
  %1105 = vperm.xlu0 %1104, %v1023
  %v1106 = vpop.permute.xlu0 %1105
  %v1108 = vmul.f32 %v1106, %v788
  %v1109 = vadd.f32 %v1108, %v793
  %v1110 = vmul.f32 %v1109, %v798
  %v1111 = vsel %vm800, %v1110, 0.0
  %1112 = vadd.xlane.f32.xlu0 %v1111
  %v1113 = vpop.xlane.xlu0 %1112
  %v1114 = vadd.f32 %v1113, %v807
  %v1115 = vxor.u32 %v1114, 2147483648
  %v1116 = vmul.f32 %v1115, 1.442695
  %v1117 = vpow.pop %v1116
  %v1118 = vadd.f32 %v1117, 1.0
  %v1119 = vrcp.pop %v1118
  %v1120 = vmul.f32 1.0, %v1119
  %1122 = vset.pattern.permute.xlu0 1
  %1123 = vperm.xlu0 %1122, %v1120
  %v1124 = vpop.permute.xlu0 %1123
  %v1126 = vmul.f32 %v1124, %v1102
  %v1127 = vsub.f32 1.0, %v1120
  %1129 = vset.pattern.permute.xlu0 1
  %1130 = vperm.xlu0 %1129, %v1127
  %v1131 = vpop.permute.xlu0 %1130
  %v1133 = vmul.f32 %v1131, %v1025
  %1135 = vrot.lane.b32.xlu0 %v1133, 96
  %v1136 = vpop.permute.xlu0 %1135
  %v1138 = vadd.f32 %v1126, %v1136
  %s1139 = scalar_lea.vmem %s0, 10
  %v1140 = vld [vmem:[%s1139] sm:$0x3]
  %v1142 = vsel %vm47, %v1025, 0
  %1144 = vmatprep.subr.mxu0 0.0
  %1145 = vmatpush1.msra.mxu0 0.0
  %1146 = vmatprep.subr.mxu0 0.0
  %1147 = vmatpush1.msra.mxu0 0.0
  %1148 = vmatprep.subr.mxu0 0.0
  %1149 = vmatpush1.msra.mxu0 0.0
  %1150 = vmatprep.subr.mxu0 0.0
  %1151 = vmatpush1.msra.mxu0 0.0
  %1152 = vmatprep.subr.mxu0 0.0
  %1153 = vmatpush1.msra.mxu0 0.0
  %1154 = vmatprep.subr.mxu0 0.0
  %1155 = vmatpush1.msra.mxu0 0.0
  %1156 = vmatprep.subr.mxu0 0.0
  %1157 = vmatpush1.msra.mxu0 0.0
  %1158 = vmatprep.subr.mxu0 0.0
  %1159 = vmatpush1.msra.mxu0 0.0
  %1160 = vmatprep.subr.mxu0 0.0
  %1161 = vmatpush1.msra.mxu0 %v32
  %1162 = vmatprep.subr.mxu0 0.0
  %1163 = vmatpush1.msra.mxu0 %v31
  %1164 = vmatprep.subr.mxu0 0.0
  %1165 = vmatpush1.msra.mxu0 %v30
  %1166 = vmatprep.subr.mxu0 0.0
  %1167 = vmatpush1.msra.mxu0 %v29
  %1168 = vmatprep.subr.mxu0 0.0
  %1169 = vmatpush1.msra.mxu0 %v28
  %1170 = vmatprep.subr.mxu0 0.0
  %1171 = vmatpush1.msra.mxu0 %v27
  %1172 = vmatprep.subr.mxu0 0.0
  %1173 = vmatpush1.msra.mxu0 %v26
  %1174 = vmatprep.subr.mxu0 0.0
  %1175 = vmatpush1.msra.mxu0 %v25
  %1176 = vmatprep.subr.mxu0 0.0
  %1177 = vmatpush2.msra.mxu0 0.0
  %1178 = vmatprep.subr.mxu0 0.0
  %1179 = vmatpush2.msra.mxu0 0.0
  %1180 = vmatprep.subr.mxu0 0.0
  %1181 = vmatpush2.msra.mxu0 0.0
  %1182 = vmatprep.subr.mxu0 0.0
  %1183 = vmatpush2.msra.mxu0 0.0
  %1184 = vmatprep.subr.mxu0 0.0
  %1185 = vmatpush2.msra.mxu0 0.0
  %1186 = vmatprep.subr.mxu0 0.0
  %1187 = vmatpush2.msra.mxu0 0.0
  %1188 = vmatprep.subr.mxu0 0.0
  %1189 = vmatpush2.msra.mxu0 0.0
  %1190 = vmatprep.subr.mxu0 0.0
  %1191 = vmatpush2.msra.mxu0 0.0
  %1192 = vmatprep.subr.mxu0 0.0
  %1193 = vmatpush2.msra.mxu0 0.0
  %1194 = vmatprep.subr.mxu0 0.0
  %1195 = vmatpush2.msra.mxu0 0.0
  %1196 = vmatprep.subr.mxu0 0.0
  %1197 = vmatpush2.msra.mxu0 0.0
  %1198 = vmatprep.subr.mxu0 0.0
  %1199 = vmatpush2.msra.mxu0 0.0
  %1200 = vmatprep.subr.mxu0 0.0
  %1201 = vmatpush2.msra.mxu0 0.0
  %1202 = vmatprep.subr.mxu0 0.0
  %1203 = vmatpush2.msra.mxu0 0.0
  %1204 = vmatprep.subr.mxu0 0.0
  %1205 = vmatpush2.msra.mxu0 0.0
  %1206 = vmatprep.subr.mxu0 0.0
  %1207 = vmatpush2.msra.mxu0 0.0
  %1208 = vmatprep.mubr.f32.mxu0 0.0
  %1209 = vmatmul.mubr.f32.gmra.mxu0 %v1142
  %v1210 = vpop.f32.mrf.mxu0
  %v1211 = vadd.f32 0.0, %v1210
  %v1212 = vpop.f32.mrf.mxu0
  %1213 = vdwg.mxu0
  %v1214 = vadd.f32 %v1140, %v1211
  %v1215 = vtanh.pop %v1214
  %s1216 = scalar_lea.vmem %s1, 10
  %v1217 = vld [vmem:[%s1216] sm:$0x3]
  %v1219 = vsel %vm124, %v1102, 0
  %1221 = vmatprep.subr.mxu0 0.0
  %1222 = vmatpush1.msra.mxu0 0.0
  %1223 = vmatprep.subr.mxu0 0.0
  %1224 = vmatpush1.msra.mxu0 0.0
  %1225 = vmatprep.subr.mxu0 0.0
  %1226 = vmatpush1.msra.mxu0 0.0
  %1227 = vmatprep.subr.mxu0 0.0
  %1228 = vmatpush1.msra.mxu0 0.0
  %1229 = vmatprep.subr.mxu0 0.0
  %1230 = vmatpush1.msra.mxu0 0.0
  %1231 = vmatprep.subr.mxu0 0.0
  %1232 = vmatpush1.msra.mxu0 0.0
  %1233 = vmatprep.subr.mxu0 0.0
  %1234 = vmatpush1.msra.mxu0 0.0
  %1235 = vmatprep.subr.mxu0 0.0
  %1236 = vmatpush1.msra.mxu0 0.0
  %1237 = vmatprep.subr.mxu0 0.0
  %1238 = vmatpush1.msra.mxu0 0.0
  %1239 = vmatprep.subr.mxu0 0.0
  %1240 = vmatpush1.msra.mxu0 0.0
  %1241 = vmatprep.subr.mxu0 0.0
  %1242 = vmatpush1.msra.mxu0 0.0
  %1243 = vmatprep.subr.mxu0 0.0
  %1244 = vmatpush1.msra.mxu0 0.0
  %1245 = vmatprep.subr.mxu0 0.0
  %1246 = vmatpush1.msra.mxu0 %v36
  %1247 = vmatprep.subr.mxu0 0.0
  %1248 = vmatpush1.msra.mxu0 %v35
  %1249 = vmatprep.subr.mxu0 0.0
  %1250 = vmatpush1.msra.mxu0 %v34
  %1251 = vmatprep.subr.mxu0 0.0
  %1252 = vmatpush1.msra.mxu0 %v33
  %1253 = vmatprep.subr.mxu0 0.0
  %1254 = vmatpush2.msra.mxu0 0.0
  %1255 = vmatprep.subr.mxu0 0.0
  %1256 = vmatpush2.msra.mxu0 0.0
  %1257 = vmatprep.subr.mxu0 0.0
  %1258 = vmatpush2.msra.mxu0 0.0
  %1259 = vmatprep.subr.mxu0 0.0
  %1260 = vmatpush2.msra.mxu0 0.0
  %1261 = vmatprep.subr.mxu0 0.0
  %1262 = vmatpush2.msra.mxu0 0.0
  %1263 = vmatprep.subr.mxu0 0.0
  %1264 = vmatpush2.msra.mxu0 0.0
  %1265 = vmatprep.subr.mxu0 0.0
  %1266 = vmatpush2.msra.mxu0 0.0
  %1267 = vmatprep.subr.mxu0 0.0
  %1268 = vmatpush2.msra.mxu0 0.0
  %1269 = vmatprep.subr.mxu0 0.0
  %1270 = vmatpush2.msra.mxu0 0.0
  %1271 = vmatprep.subr.mxu0 0.0
  %1272 = vmatpush2.msra.mxu0 0.0
  %1273 = vmatprep.subr.mxu0 0.0
  %1274 = vmatpush2.msra.mxu0 0.0
  %1275 = vmatprep.subr.mxu0 0.0
  %1276 = vmatpush2.msra.mxu0 0.0
  %1277 = vmatprep.subr.mxu0 0.0
  %1278 = vmatpush2.msra.mxu0 0.0
  %1279 = vmatprep.subr.mxu0 0.0
  %1280 = vmatpush2.msra.mxu0 0.0
  %1281 = vmatprep.subr.mxu0 0.0
  %1282 = vmatpush2.msra.mxu0 0.0
  %1283 = vmatprep.subr.mxu0 0.0
  %1284 = vmatpush2.msra.mxu0 0.0
  %1285 = vmatprep.mubr.f32.mxu0 0.0
  %1286 = vmatmul.mubr.f32.gmra.mxu0 %v1219
  %v1287 = vpop.f32.mrf.mxu0
  %v1288 = vadd.f32 0.0, %v1287
  %v1289 = vpop.f32.mrf.mxu0
  %1290 = vdwg.mxu0
  %v1291 = vadd.f32 %v1217, %v1288
  %v1292 = vtanh.pop %v1291
  %v1293 = vmul.f32 %v1124, %v1292
  %v1294 = vmul.f32 %v1131, %v1215
  %1296 = vrot.lane.b32.xlu0 %v1294, 96
  %v1297 = vpop.permute.xlu0 %1296
  %v1299 = vadd.f32 %v1293, %v1297
  %s1300 = scalar_lea.vmem %s0, 12
  %v1301 = vld [vmem:[%s1300] sm:$0x3]
  %v1303 = vsel %vm47, %v1215, 0
  %1305 = vmatprep.subr.mxu0 0.0
  %1306 = vmatpush1.msra.mxu0 0.0
  %1307 = vmatprep.subr.mxu0 0.0
  %1308 = vmatpush1.msra.mxu0 0.0
  %1309 = vmatprep.subr.mxu0 0.0
  %1310 = vmatpush1.msra.mxu0 0.0
  %1311 = vmatprep.subr.mxu0 0.0
  %1312 = vmatpush1.msra.mxu0 0.0
  %1313 = vmatprep.subr.mxu0 0.0
  %1314 = vmatpush1.msra.mxu0 0.0
  %1315 = vmatprep.subr.mxu0 0.0
  %1316 = vmatpush1.msra.mxu0 0.0
  %1317 = vmatprep.subr.mxu0 0.0
  %1318 = vmatpush1.msra.mxu0 0.0
  %1319 = vmatprep.subr.mxu0 0.0
  %1320 = vmatpush1.msra.mxu0 0.0
  %1321 = vmatprep.subr.mxu0 0.0
  %1322 = vmatpush1.msra.mxu0 %v32
  %1323 = vmatprep.subr.mxu0 0.0
  %1324 = vmatpush1.msra.mxu0 %v31
  %1325 = vmatprep.subr.mxu0 0.0
  %1326 = vmatpush1.msra.mxu0 %v30
  %1327 = vmatprep.subr.mxu0 0.0
  %1328 = vmatpush1.msra.mxu0 %v29
  %1329 = vmatprep.subr.mxu0 0.0
  %1330 = vmatpush1.msra.mxu0 %v28
  %1331 = vmatprep.subr.mxu0 0.0
  %1332 = vmatpush1.msra.mxu0 %v27
  %1333 = vmatprep.subr.mxu0 0.0
  %1334 = vmatpush1.msra.mxu0 %v26
  %1335 = vmatprep.subr.mxu0 0.0
  %1336 = vmatpush1.msra.mxu0 %v25
  %1337 = vmatprep.subr.mxu0 0.0
  %1338 = vmatpush2.msra.mxu0 0.0
  %1339 = vmatprep.subr.mxu0 0.0
  %1340 = vmatpush2.msra.mxu0 0.0
  %1341 = vmatprep.subr.mxu0 0.0
  %1342 = vmatpush2.msra.mxu0 0.0
  %1343 = vmatprep.subr.mxu0 0.0
  %1344 = vmatpush2.msra.mxu0 0.0
  %1345 = vmatprep.subr.mxu0 0.0
  %1346 = vmatpush2.msra.mxu0 0.0
  %1347 = vmatprep.subr.mxu0 0.0
  %1348 = vmatpush2.msra.mxu0 0.0
  %1349 = vmatprep.subr.mxu0 0.0
  %1350 = vmatpush2.msra.mxu0 0.0
  %1351 = vmatprep.subr.mxu0 0.0
  %1352 = vmatpush2.msra.mxu0 0.0
  %1353 = vmatprep.subr.mxu0 0.0
  %1354 = vmatpush2.msra.mxu0 0.0
  %1355 = vmatprep.subr.mxu0 0.0
  %1356 = vmatpush2.msra.mxu0 0.0
  %1357 = vmatprep.subr.mxu0 0.0
  %1358 = vmatpush2.msra.mxu0 0.0
  %1359 = vmatprep.subr.mxu0 0.0
  %1360 = vmatpush2.msra.mxu0 0.0
  %1361 = vmatprep.subr.mxu0 0.0
  %1362 = vmatpush2.msra.mxu0 0.0
  %1363 = vmatprep.subr.mxu0 0.0
  %1364 = vmatpush2.msra.mxu0 0.0
  %1365 = vmatprep.subr.mxu0 0.0
  %1366 = vmatpush2.msra.mxu0 0.0
  %1367 = vmatprep.subr.mxu0 0.0
  %1368 = vmatpush2.msra.mxu0 0.0
  %1369 = vmatprep.mubr.f32.mxu0 0.0
  %1370 = vmatmul.mubr.f32.gmra.mxu0 %v1303
  %v1371 = vpop.f32.mrf.mxu0
  %v1372 = vadd.f32 0.0, %v1371
  %v1373 = vpop.f32.mrf.mxu0
  %1374 = vdwg.mxu0
  %v1375 = vadd.f32 %v1301, %v1372
  %v1376 = vtanh.pop %v1375
  %v1378 = vrot.slane %v1376, 7
  %vm1380 = vcmask 1040384
  %v1381 = vsel %vm1380, %v583, %v1378
  %v1382 = vmul.f32 %v41, 0.2
  %v1383 = vmul.f32 %v41, 0.3
  %v1385 = vrot.slane %v1383, 7
  %v1387 = vsel %vm1380, %v1382, %v1385
  %v1389 = vsel %vm124, %v1381, 0
  %1391 = vmatprep.subr.mxu0 0.0
  %1392 = vmatpush1.msra.mxu0 0.0
  %1393 = vmatprep.subr.mxu0 0.0
  %1394 = vmatpush1.msra.mxu0 0.0
  %1395 = vmatprep.subr.mxu0 0.0
  %1396 = vmatpush1.msra.mxu0 0.0
  %1397 = vmatprep.subr.mxu0 0.0
  %1398 = vmatpush1.msra.mxu0 0.0
  %1399 = vmatprep.subr.mxu0 0.0
  %1400 = vmatpush1.msra.mxu0 0.0
  %1401 = vmatprep.subr.mxu0 0.0
  %1402 = vmatpush1.msra.mxu0 0.0
  %1403 = vmatprep.subr.mxu0 0.0
  %1404 = vmatpush1.msra.mxu0 0.0
  %1405 = vmatprep.subr.mxu0 0.0
  %1406 = vmatpush1.msra.mxu0 0.0
  %1407 = vmatprep.subr.mxu0 0.0
  %1408 = vmatpush1.msra.mxu0 0.0
  %1409 = vmatprep.subr.mxu0 0.0
  %1410 = vmatpush1.msra.mxu0 0.0
  %1411 = vmatprep.subr.mxu0 0.0
  %1412 = vmatpush1.msra.mxu0 0.0
  %1413 = vmatprep.subr.mxu0 0.0
  %1414 = vmatpush1.msra.mxu0 0.0
  %1415 = vmatprep.subr.mxu0 0.0
  %1416 = vmatpush1.msra.mxu0 %v40
  %1417 = vmatprep.subr.mxu0 0.0
  %1418 = vmatpush1.msra.mxu0 %v39
  %1419 = vmatprep.subr.mxu0 0.0
  %1420 = vmatpush1.msra.mxu0 %v38
  %1421 = vmatprep.subr.mxu0 0.0
  %1422 = vmatpush1.msra.mxu0 %v37
  %1423 = vmatprep.subr.mxu0 0.0
  %1424 = vmatpush2.msra.mxu0 0.0
  %1425 = vmatprep.subr.mxu0 0.0
  %1426 = vmatpush2.msra.mxu0 0.0
  %1427 = vmatprep.subr.mxu0 0.0
  %1428 = vmatpush2.msra.mxu0 0.0
  %1429 = vmatprep.subr.mxu0 0.0
  %1430 = vmatpush2.msra.mxu0 0.0
  %1431 = vmatprep.subr.mxu0 0.0
  %1432 = vmatpush2.msra.mxu0 0.0
  %1433 = vmatprep.subr.mxu0 0.0
  %1434 = vmatpush2.msra.mxu0 0.0
  %1435 = vmatprep.subr.mxu0 0.0
  %1436 = vmatpush2.msra.mxu0 0.0
  %1437 = vmatprep.subr.mxu0 0.0
  %1438 = vmatpush2.msra.mxu0 0.0
  %1439 = vmatprep.subr.mxu0 0.0
  %1440 = vmatpush2.msra.mxu0 0.0
  %1441 = vmatprep.subr.mxu0 0.0
  %1442 = vmatpush2.msra.mxu0 0.0
  %1443 = vmatprep.subr.mxu0 0.0
  %1444 = vmatpush2.msra.mxu0 0.0
  %1445 = vmatprep.subr.mxu0 0.0
  %1446 = vmatpush2.msra.mxu0 0.0
  %1447 = vmatprep.subr.mxu0 0.0
  %1448 = vmatpush2.msra.mxu0 0.0
  %1449 = vmatprep.subr.mxu0 0.0
  %1450 = vmatpush2.msra.mxu0 0.0
  %1451 = vmatprep.subr.mxu0 0.0
  %1452 = vmatpush2.msra.mxu0 0.0
  %1453 = vmatprep.subr.mxu0 0.0
  %1454 = vmatpush2.msra.mxu0 0.0
  %1455 = vmatprep.mubr.f32.mxu0 0.0
  %1456 = vmatmul.mubr.f32.gmra.mxu0 %v1389
  %v1457 = vpop.f32.mrf.mxu0
  %v1458 = vadd.f32 %v1387, %v1457
  %v1459 = vpop.f32.mrf.mxu0
  %1460 = vdwg.mxu0
  %v1461 = vlaneseq
  %v1462 = vshrl.u32 %v1461, 7
  %v1463 = vsub.s32 1, %v1462
  %v1464 = vrot.slane %v41, %v1463
  %v1465 = vadd.f32 %v1458, %v1464
  %v1466 = vlaneseq
  %v1467 = vshrl.u32 %v1466, 7
  %v1468 = vsub.s32 2, %v1467
  %v1469 = vrot.slane %v41, %v1468
  %v1470 = vmul.f32 %v1465, %v1469
  %v1471 = vsel %vm800, %v1470, 0.0
  %1472 = vadd.xlane.f32.xlu0 %v1471
  %v1473 = vpop.xlane.xlu0 %1472
  %v1474 = vadd.f32 %v1473, %v807
  %v1475 = vtanh.pop %v1474
  %vm1476 = vcmask 1024
  %v1477 = vsel %vm1476, %v1475, -inf
  %v1478 = vrot.slane %v1477, 4
  %v1479 = vmax.f32 %v1477, %v1478
  %v1480 = vrot.slane %v1479, 2
  %v1481 = vmax.f32 %v1479, %v1480
  %v1482 = vrot.slane %v1481, 1
  %v1483 = vmax.f32 %v1481, %v1482
  %v1484 = vsub.f32 %v1475, %v1483
  %v1485 = vmul.f32 %v1484, 1.442695
  %v1486 = vpow.pop %v1485
  %v1487 = vsel %vm1476, %v1486, 0.0
  %v1488 = vrot.slane %v1487, 4
  %v1489 = vadd.f32 %v1487, %v1488
  %v1490 = vrot.slane %v1489, 2
  %v1491 = vadd.f32 %v1489, %v1490
  %v1492 = vrot.slane %v1491, 1
  %v1493 = vadd.f32 %v1491, %v1492
  %v1494 = vrcp.pop %v1493
  %v1495 = vmul.f32 %v1486, %v1494
  %1497 = vset.pattern.permute.xlu0 0
  %1498 = vperm.xlu0 %1497, %v1495
  %v1499 = vpop.permute.xlu0 %1498
  %v1501 = vmul.f32 %v1499, %v1381
  %vm1502 = vcmask 254976
  %v1503 = vsel %vm1502, %v1501, 0.0
  %v1504 = vrot.slane %v1503, 4
  %v1505 = vadd.f32 %v1503, %v1504
  %v1506 = vrot.slane %v1505, 2
  %v1507 = vadd.f32 %v1505, %v1506
  %v1508 = vrot.slane %v1507, 1
  %v1509 = vadd.f32 %v1507, %v1508
  %v1510 = vmul.f32 %v1495, 0.2
  %v1511 = vmul.f32 %v1495, 0.3
  %v1513 = vrot.slane %v1511, 1
  %v1515 = vadd.f32 %v1510, %v1513
  %v1516 = vsel %vm689, %v1509, %v1292
  %v1517 = vlaneseq
  %v1518 = vshrl.u32 %v1517, 7
  %v1519 = vsub.s32 0, %v1518
  %v1520 = vrot.slane %v1515, %v1519
  %v1521 = vsel %vm687, %v1520, %v1023
  %v1522 = vsel %vm701, 0.0, %v1376
  %s1523 = scalar_lea.vmem %s1, 12
  %v1524 = vld [vmem:[%s1523] sm:$0x3]
  %v1526 = vsel %vm124, %v1516, 0
  %1528 = vmatprep.subr.mxu0 0.0
  %1529 = vmatpush1.msra.mxu0 0.0
  %1530 = vmatprep.subr.mxu0 0.0
  %1531 = vmatpush1.msra.mxu0 0.0
  %1532 = vmatprep.subr.mxu0 0.0
  %1533 = vmatpush1.msra.mxu0 0.0
  %1534 = vmatprep.subr.mxu0 0.0
  %1535 = vmatpush1.msra.mxu0 0.0
  %1536 = vmatprep.subr.mxu0 0.0
  %1537 = vmatpush1.msra.mxu0 0.0
  %1538 = vmatprep.subr.mxu0 0.0
  %1539 = vmatpush1.msra.mxu0 0.0
  %1540 = vmatprep.subr.mxu0 0.0
  %1541 = vmatpush1.msra.mxu0 0.0
  %1542 = vmatprep.subr.mxu0 0.0
  %1543 = vmatpush1.msra.mxu0 0.0
  %1544 = vmatprep.subr.mxu0 0.0
  %1545 = vmatpush1.msra.mxu0 0.0
  %1546 = vmatprep.subr.mxu0 0.0
  %1547 = vmatpush1.msra.mxu0 0.0
  %1548 = vmatprep.subr.mxu0 0.0
  %1549 = vmatpush1.msra.mxu0 0.0
  %1550 = vmatprep.subr.mxu0 0.0
  %1551 = vmatpush1.msra.mxu0 0.0
  %1552 = vmatprep.subr.mxu0 0.0
  %1553 = vmatpush1.msra.mxu0 %v36
  %1554 = vmatprep.subr.mxu0 0.0
  %1555 = vmatpush1.msra.mxu0 %v35
  %1556 = vmatprep.subr.mxu0 0.0
  %1557 = vmatpush1.msra.mxu0 %v34
  %1558 = vmatprep.subr.mxu0 0.0
  %1559 = vmatpush1.msra.mxu0 %v33
  %1560 = vmatprep.subr.mxu0 0.0
  %1561 = vmatpush2.msra.mxu0 0.0
  %1562 = vmatprep.subr.mxu0 0.0
  %1563 = vmatpush2.msra.mxu0 0.0
  %1564 = vmatprep.subr.mxu0 0.0
  %1565 = vmatpush2.msra.mxu0 0.0
  %1566 = vmatprep.subr.mxu0 0.0
  %1567 = vmatpush2.msra.mxu0 0.0
  %1568 = vmatprep.subr.mxu0 0.0
  %1569 = vmatpush2.msra.mxu0 0.0
  %1570 = vmatprep.subr.mxu0 0.0
  %1571 = vmatpush2.msra.mxu0 0.0
  %1572 = vmatprep.subr.mxu0 0.0
  %1573 = vmatpush2.msra.mxu0 0.0
  %1574 = vmatprep.subr.mxu0 0.0
  %1575 = vmatpush2.msra.mxu0 0.0
  %1576 = vmatprep.subr.mxu0 0.0
  %1577 = vmatpush2.msra.mxu0 0.0
  %1578 = vmatprep.subr.mxu0 0.0
  %1579 = vmatpush2.msra.mxu0 0.0
  %1580 = vmatprep.subr.mxu0 0.0
  %1581 = vmatpush2.msra.mxu0 0.0
  %1582 = vmatprep.subr.mxu0 0.0
  %1583 = vmatpush2.msra.mxu0 0.0
  %1584 = vmatprep.subr.mxu0 0.0
  %1585 = vmatpush2.msra.mxu0 0.0
  %1586 = vmatprep.subr.mxu0 0.0
  %1587 = vmatpush2.msra.mxu0 0.0
  %1588 = vmatprep.subr.mxu0 0.0
  %1589 = vmatpush2.msra.mxu0 0.0
  %1590 = vmatprep.subr.mxu0 0.0
  %1591 = vmatpush2.msra.mxu0 0.0
  %1592 = vmatprep.mubr.f32.mxu0 0.0
  %1593 = vmatmul.mubr.f32.gmra.mxu0 %v1526
  %v1594 = vpop.f32.mrf.mxu0
  %v1595 = vadd.f32 0.0, %v1594
  %v1596 = vpop.f32.mrf.mxu0
  %1597 = vdwg.mxu0
  %v1598 = vadd.f32 %v1524, %v1595
  %v1599 = vtanh.pop %v1598
  %1601 = vset.pattern.permute.xlu0 0
  %1602 = vperm.xlu0 %1601, %v1521
  %v1603 = vpop.permute.xlu0 %1602
  %v1605 = vmul.f32 %v1603, %v788
  %v1606 = vadd.f32 %v1605, %v793
  %v1607 = vmul.f32 %v1606, %v798
  %v1608 = vsel %vm800, %v1607, 0.0
  %1609 = vadd.xlane.f32.xlu0 %v1608
  %v1610 = vpop.xlane.xlu0 %1609
  %v1611 = vadd.f32 %v1610, %v807
  %v1612 = vxor.u32 %v1611, 2147483648
  %v1613 = vmul.f32 %v1612, 1.442695
  %v1614 = vpow.pop %v1613
  %v1615 = vadd.f32 %v1614, 1.0
  %v1616 = vrcp.pop %v1615
  %v1617 = vmul.f32 1.0, %v1616
  %1619 = vset.pattern.permute.xlu0 1
  %1620 = vperm.xlu0 %1619, %v1617
  %v1621 = vpop.permute.xlu0 %1620
  %v1623 = vmul.f32 %v1621, %v1599
  %v1624 = vsub.f32 1.0, %v1617
  %1626 = vset.pattern.permute.xlu0 1
  %1627 = vperm.xlu0 %1626, %v1624
  %v1628 = vpop.permute.xlu0 %1627
  %v1630 = vmul.f32 %v1628, %v1522
  %1632 = vrot.lane.b32.xlu0 %v1630, 96
  %v1633 = vpop.permute.xlu0 %1632
  %v1635 = vadd.f32 %v1623, %v1633
  %s1636 = scalar_lea.vmem %s0, 14
  %v1637 = vld [vmem:[%s1636] sm:$0x3]
  %v1639 = vsel %vm47, %v1522, 0
  %1641 = vmatprep.subr.mxu0 0.0
  %1642 = vmatpush1.msra.mxu0 0.0
  %1643 = vmatprep.subr.mxu0 0.0
  %1644 = vmatpush1.msra.mxu0 0.0
  %1645 = vmatprep.subr.mxu0 0.0
  %1646 = vmatpush1.msra.mxu0 0.0
  %1647 = vmatprep.subr.mxu0 0.0
  %1648 = vmatpush1.msra.mxu0 0.0
  %1649 = vmatprep.subr.mxu0 0.0
  %1650 = vmatpush1.msra.mxu0 0.0
  %1651 = vmatprep.subr.mxu0 0.0
  %1652 = vmatpush1.msra.mxu0 0.0
  %1653 = vmatprep.subr.mxu0 0.0
  %1654 = vmatpush1.msra.mxu0 0.0
  %1655 = vmatprep.subr.mxu0 0.0
  %1656 = vmatpush1.msra.mxu0 0.0
  %1657 = vmatprep.subr.mxu0 0.0
  %1658 = vmatpush1.msra.mxu0 %v32
  %1659 = vmatprep.subr.mxu0 0.0
  %1660 = vmatpush1.msra.mxu0 %v31
  %1661 = vmatprep.subr.mxu0 0.0
  %1662 = vmatpush1.msra.mxu0 %v30
  %1663 = vmatprep.subr.mxu0 0.0
  %1664 = vmatpush1.msra.mxu0 %v29
  %1665 = vmatprep.subr.mxu0 0.0
  %1666 = vmatpush1.msra.mxu0 %v28
  %1667 = vmatprep.subr.mxu0 0.0
  %1668 = vmatpush1.msra.mxu0 %v27
  %1669 = vmatprep.subr.mxu0 0.0
  %1670 = vmatpush1.msra.mxu0 %v26
  %1671 = vmatprep.subr.mxu0 0.0
  %1672 = vmatpush1.msra.mxu0 %v25
  %1673 = vmatprep.subr.mxu0 0.0
  %1674 = vmatpush2.msra.mxu0 0.0
  %1675 = vmatprep.subr.mxu0 0.0
  %1676 = vmatpush2.msra.mxu0 0.0
  %1677 = vmatprep.subr.mxu0 0.0
  %1678 = vmatpush2.msra.mxu0 0.0
  %1679 = vmatprep.subr.mxu0 0.0
  %1680 = vmatpush2.msra.mxu0 0.0
  %1681 = vmatprep.subr.mxu0 0.0
  %1682 = vmatpush2.msra.mxu0 0.0
  %1683 = vmatprep.subr.mxu0 0.0
  %1684 = vmatpush2.msra.mxu0 0.0
  %1685 = vmatprep.subr.mxu0 0.0
  %1686 = vmatpush2.msra.mxu0 0.0
  %1687 = vmatprep.subr.mxu0 0.0
  %1688 = vmatpush2.msra.mxu0 0.0
  %1689 = vmatprep.subr.mxu0 0.0
  %1690 = vmatpush2.msra.mxu0 0.0
  %1691 = vmatprep.subr.mxu0 0.0
  %1692 = vmatpush2.msra.mxu0 0.0
  %1693 = vmatprep.subr.mxu0 0.0
  %1694 = vmatpush2.msra.mxu0 0.0
  %1695 = vmatprep.subr.mxu0 0.0
  %1696 = vmatpush2.msra.mxu0 0.0
  %1697 = vmatprep.subr.mxu0 0.0
  %1698 = vmatpush2.msra.mxu0 0.0
  %1699 = vmatprep.subr.mxu0 0.0
  %1700 = vmatpush2.msra.mxu0 0.0
  %1701 = vmatprep.subr.mxu0 0.0
  %1702 = vmatpush2.msra.mxu0 0.0
  %1703 = vmatprep.subr.mxu0 0.0
  %1704 = vmatpush2.msra.mxu0 0.0
  %1705 = vmatprep.mubr.f32.mxu0 0.0
  %1706 = vmatmul.mubr.f32.gmra.mxu0 %v1639
  %v1707 = vpop.f32.mrf.mxu0
  %v1708 = vadd.f32 0.0, %v1707
  %v1709 = vpop.f32.mrf.mxu0
  %1710 = vdwg.mxu0
  %v1711 = vadd.f32 %v1637, %v1708
  %v1712 = vtanh.pop %v1711
  %s1713 = scalar_lea.vmem %s1, 14
  %v1714 = vld [vmem:[%s1713] sm:$0x3]
  %v1716 = vsel %vm124, %v1599, 0
  %1718 = vmatprep.subr.mxu0 0.0
  %1719 = vmatpush1.msra.mxu0 0.0
  %1720 = vmatprep.subr.mxu0 0.0
  %1721 = vmatpush1.msra.mxu0 0.0
  %1722 = vmatprep.subr.mxu0 0.0
  %1723 = vmatpush1.msra.mxu0 0.0
  %1724 = vmatprep.subr.mxu0 0.0
  %1725 = vmatpush1.msra.mxu0 0.0
  %1726 = vmatprep.subr.mxu0 0.0
  %1727 = vmatpush1.msra.mxu0 0.0
  %1728 = vmatprep.subr.mxu0 0.0
  %1729 = vmatpush1.msra.mxu0 0.0
  %1730 = vmatprep.subr.mxu0 0.0
  %1731 = vmatpush1.msra.mxu0 0.0
  %1732 = vmatprep.subr.mxu0 0.0
  %1733 = vmatpush1.msra.mxu0 0.0
  %1734 = vmatprep.subr.mxu0 0.0
  %1735 = vmatpush1.msra.mxu0 0.0
  %1736 = vmatprep.subr.mxu0 0.0
  %1737 = vmatpush1.msra.mxu0 0.0
  %1738 = vmatprep.subr.mxu0 0.0
  %1739 = vmatpush1.msra.mxu0 0.0
  %1740 = vmatprep.subr.mxu0 0.0
  %1741 = vmatpush1.msra.mxu0 0.0
  %1742 = vmatprep.subr.mxu0 0.0
  %1743 = vmatpush1.msra.mxu0 %v36
  %1744 = vmatprep.subr.mxu0 0.0
  %1745 = vmatpush1.msra.mxu0 %v35
  %1746 = vmatprep.subr.mxu0 0.0
  %1747 = vmatpush1.msra.mxu0 %v34
  %1748 = vmatprep.subr.mxu0 0.0
  %1749 = vmatpush1.msra.mxu0 %v33
  %1750 = vmatprep.subr.mxu0 0.0
  %1751 = vmatpush2.msra.mxu0 0.0
  %1752 = vmatprep.subr.mxu0 0.0
  %1753 = vmatpush2.msra.mxu0 0.0
  %1754 = vmatprep.subr.mxu0 0.0
  %1755 = vmatpush2.msra.mxu0 0.0
  %1756 = vmatprep.subr.mxu0 0.0
  %1757 = vmatpush2.msra.mxu0 0.0
  %1758 = vmatprep.subr.mxu0 0.0
  %1759 = vmatpush2.msra.mxu0 0.0
  %1760 = vmatprep.subr.mxu0 0.0
  %1761 = vmatpush2.msra.mxu0 0.0
  %1762 = vmatprep.subr.mxu0 0.0
  %1763 = vmatpush2.msra.mxu0 0.0
  %1764 = vmatprep.subr.mxu0 0.0
  %1765 = vmatpush2.msra.mxu0 0.0
  %1766 = vmatprep.subr.mxu0 0.0
  %1767 = vmatpush2.msra.mxu0 0.0
  %1768 = vmatprep.subr.mxu0 0.0
  %1769 = vmatpush2.msra.mxu0 0.0
  %1770 = vmatprep.subr.mxu0 0.0
  %1771 = vmatpush2.msra.mxu0 0.0
  %1772 = vmatprep.subr.mxu0 0.0
  %1773 = vmatpush2.msra.mxu0 0.0
  %1774 = vmatprep.subr.mxu0 0.0
  %1775 = vmatpush2.msra.mxu0 0.0
  %1776 = vmatprep.subr.mxu0 0.0
  %1777 = vmatpush2.msra.mxu0 0.0
  %1778 = vmatprep.subr.mxu0 0.0
  %1779 = vmatpush2.msra.mxu0 0.0
  %1780 = vmatprep.subr.mxu0 0.0
  %1781 = vmatpush2.msra.mxu0 0.0
  %1782 = vmatprep.mubr.f32.mxu0 0.0
  %1783 = vmatmul.mubr.f32.gmra.mxu0 %v1716
  %v1784 = vpop.f32.mrf.mxu0
  %v1785 = vadd.f32 0.0, %v1784
  %v1786 = vpop.f32.mrf.mxu0
  %1787 = vdwg.mxu0
  %v1788 = vadd.f32 %v1714, %v1785
  %v1789 = vtanh.pop %v1788
  %v1790 = vmul.f32 %v1621, %v1789
  %v1791 = vmul.f32 %v1628, %v1712
  %1793 = vrot.lane.b32.xlu0 %v1791, 96
  %v1794 = vpop.permute.xlu0 %1793
  %v1796 = vadd.f32 %v1790, %v1794
  %v1797 = vrot.slane %v275, 6
  %v1799 = vrot.slane %v429, 4
  %v1802 = vrot.slane %v837, 2
  %1803 = vrot.lane.b32.xlu0 %v1802, 32
  %v1804 = vpop.permute.xlu0 %1803
  %1807 = vrot.lane.b32.xlu0 %v1138, 32
  %v1808 = vpop.permute.xlu0 %1807
  %v1811 = vrot.slane %v1299, 6
  %1812 = vrot.lane.b32.xlu0 %v1811, 32
  %v1813 = vpop.permute.xlu0 %1812
  %v1816 = vrot.slane %v1635, 4
  %1817 = vrot.lane.b32.xlu0 %v1816, 32
  %v1818 = vpop.permute.xlu0 %1817
  %v1821 = vrot.slane %v1796, 2
  %1822 = vrot.lane.b32.xlu0 %v1821, 32
  %v1823 = vpop.permute.xlu0 %1822
  %vm1825 = vcmask 1041408
  %v1826 = vsel %vm1825, %v122, %v1797
  %vm1827 = vcmask 1043456
  %v1828 = vsel %vm1827, %v1826, %v1799
  %vm1829 = vcmask 1045504
  %v1830 = vsel %vm1829, %v1828, %v1804
  %v1831 = vsel %vm1825, %v1808, %v1813
  %v1832 = vsel %vm1827, %v1831, %v1818
  %v1833 = vsel %vm1829, %v1832, %v1823
  %v1834 = vld [vmem:[%s5] sm:$0xff]
  %v1835 = vld [vmem:[%s5 + $0x8] sm:$0xff]
  %v1836 = vld [vmem:[%s5 + $0x10] sm:$0xff]
  %v1837 = vld [vmem:[%s5 + $0x18] sm:$0xff]
  %v1838 = vld [vmem:[%s5 + $0x20] sm:$0x1]
  %v1839 = vlaneseq
  %v1840 = vshrl.u32 %v1839, 7
  %v1841 = vsub.s32 0, %v1840
  %v1842 = vrot.slane %v1838, %v1841
  %1845 = vrot.lane.b32.xlu0 %v1830, 96
  %v1846 = vpop.permute.xlu0 %1845
  %1847 = vrot.lane.b32.xlu0 %v1833, 96
  %v1848 = vpop.permute.xlu0 %1847
  %v1849 = vsel %vm124, %v1846, 0
  %v1851 = vsel %vm124, %v1848, 0
  %1853 = vmatprep.subr.mxu0 0.0
  %1854 = vmatpush1.msra.mxu0 0.0
  %1855 = vmatprep.subr.mxu0 0.0
  %1856 = vmatpush1.msra.mxu0 0.0
  %1857 = vmatprep.subr.mxu0 0.0
  %1858 = vmatpush1.msra.mxu0 0.0
  %1859 = vmatprep.subr.mxu0 0.0
  %1860 = vmatpush1.msra.mxu0 0.0
  %1861 = vmatprep.subr.mxu0 0.0
  %1862 = vmatpush1.msra.mxu0 0.0
  %1863 = vmatprep.subr.mxu0 0.0
  %1864 = vmatpush1.msra.mxu0 0.0
  %1865 = vmatprep.subr.mxu0 0.0
  %1866 = vmatpush1.msra.mxu0 0.0
  %1867 = vmatprep.subr.mxu0 0.0
  %1868 = vmatpush1.msra.mxu0 0.0
  %1869 = vmatprep.subr.mxu0 0.0
  %1870 = vmatpush1.msra.mxu0 0.0
  %1871 = vmatprep.subr.mxu0 0.0
  %1872 = vmatpush1.msra.mxu0 0.0
  %1873 = vmatprep.subr.mxu0 0.0
  %1874 = vmatpush1.msra.mxu0 0.0
  %1875 = vmatprep.subr.mxu0 0.0
  %1876 = vmatpush1.msra.mxu0 0.0
  %1877 = vmatprep.subr.mxu0 0.0
  %1878 = vmatpush1.msra.mxu0 %v1837
  %1879 = vmatprep.subr.mxu0 0.0
  %1880 = vmatpush1.msra.mxu0 %v1836
  %1881 = vmatprep.subr.mxu0 0.0
  %1882 = vmatpush1.msra.mxu0 %v1835
  %1883 = vmatprep.subr.mxu0 0.0
  %1884 = vmatpush1.msra.mxu0 %v1834
  %1885 = vmatprep.subr.mxu0 0.0
  %1886 = vmatpush2.msra.mxu0 0.0
  %1887 = vmatprep.subr.mxu0 0.0
  %1888 = vmatpush2.msra.mxu0 0.0
  %1889 = vmatprep.subr.mxu0 0.0
  %1890 = vmatpush2.msra.mxu0 0.0
  %1891 = vmatprep.subr.mxu0 0.0
  %1892 = vmatpush2.msra.mxu0 0.0
  %1893 = vmatprep.subr.mxu0 0.0
  %1894 = vmatpush2.msra.mxu0 0.0
  %1895 = vmatprep.subr.mxu0 0.0
  %1896 = vmatpush2.msra.mxu0 0.0
  %1897 = vmatprep.subr.mxu0 0.0
  %1898 = vmatpush2.msra.mxu0 0.0
  %1899 = vmatprep.subr.mxu0 0.0
  %1900 = vmatpush2.msra.mxu0 0.0
  %1901 = vmatprep.subr.mxu0 0.0
  %1902 = vmatpush2.msra.mxu0 0.0
  %1903 = vmatprep.subr.mxu0 0.0
  %1904 = vmatpush2.msra.mxu0 0.0
  %1905 = vmatprep.subr.mxu0 0.0
  %1906 = vmatpush2.msra.mxu0 0.0
  %1907 = vmatprep.subr.mxu0 0.0
  %1908 = vmatpush2.msra.mxu0 0.0
  %1909 = vmatprep.subr.mxu0 0.0
  %1910 = vmatpush2.msra.mxu0 0.0
  %1911 = vmatprep.subr.mxu0 0.0
  %1912 = vmatpush2.msra.mxu0 0.0
  %1913 = vmatprep.subr.mxu0 0.0
  %1914 = vmatpush2.msra.mxu0 0.0
  %1915 = vmatprep.subr.mxu0 0.0
  %1916 = vmatpush2.msra.mxu0 0.0
  %1917 = vmatprep.mubr.f32.mxu0 0.0
  %1918 = vmatmul.mubr.f32.gmra.mxu0 %v1849
  %v1919 = vpop.f32.mrf.mxu0
  %v1920 = vadd.f32 %v1842, %v1919
  %v1921 = vpop.f32.mrf.mxu0
  %1922 = vmatprep.mubr.f32.mxu0 0.0
  %1923 = vmatmul.mubr.f32.gmra.mxu0 %v1851
  %v1924 = vpop.f32.mrf.mxu0
  %v1925 = vadd.f32 %v1842, %v1924
  %v1926 = vpop.f32.mrf.mxu0
  %1927 = vdwg.mxu0
  %1928 = vst.msk [vmem:[%s6] sm:$0xff] %vm124, %v1920
  %1929 = vst.msk [vmem:[%s6 + $0x8] sm:$0xff] %vm124, %v1925
  %1931 = vrot.lane.b32.xlu0 %v1712, 96
  %v1932 = vpop.permute.xlu0 %1931
  %1934 = vst.msk [vmem:[%s7] sm:$0x3] %vm1502, %v1932
  %s1935 = scalar_lea.vmem %s7, 2
  %1936 = vst.msk [vmem:[%s1935] sm:$0x3] %vm1502, %v1712
  %s1937 = scalar_lea.vmem %s7, 4
  %1938 = vst.msk [vmem:[%s1937] sm:$0x3] %vm1502, %v1789
  // Predicated region
  $region26: #{fwd.1} parent=0 // pred_check
    _
  $region27: #{fwd.1} parent=0 // pred_check_branch
    %1940 = sbr.rel (0) target = $region29
  $region28: #{fwd.1} parent=0 // pred_region
    _
  $region29: #{fwd.1} parent=0 // pred_fallthru
    _
  // Predicated region
  $region30: #{fwd.1} parent=0 // pred_check
    _
  $region31: #{fwd.1} parent=0 // pred_check_branch
    %1942 = sbr.rel (0) target = $region33
  $region32: #{fwd.1} parent=0 // pred_region
    _
  $region33: #{fwd.1} parent=0 // pred_fallthru
    _
  // Predicated region
  $region34: #{fwd.1} parent=0 // pred_check
    _
  $region35: #{fwd.1} parent=0 // pred_check_branch
    %1944 = sbr.rel (0) target = $region37
  $region36: #{fwd.1} parent=0 // pred_region
    _
  $region37: #{fwd.1} parent=0 // pred_fallthru
    _
  // Predicated region
  $region38: #{fwd.1} parent=0 // pred_check
    _
  $region39: #{fwd.1} parent=0 // pred_check_branch
    %1946 = sbr.rel (0) target = $region41
  $region40: #{fwd.1} parent=0 // pred_region
    _
  $region41: #{fwd.1} parent=0 // pred_fallthru
    _

</llo_original>
